<compile_context>
chip_gen: v7x
topology: tpu7x:2x2x1
jax: 0.10.0
libtpu: 0.0.40
codegen_flags: <defaults>
</compile_context>

<pallas_src>
import functools

import jax
import jax.numpy as jnp
from jax import lax
from jax.experimental import pallas as pl
from jax.experimental.pallas import tpu as pltpu

_LANE = 128
_SUBLANE = 8


def _round_up(x, m):
    return ((x + m - 1) // m) * m


def _rnn_chunk_kernel(seq_len, chunk, unroll, masked,
                      obs_ref, h0_ref, w_ih_ref, b_h_ref, w_hh_ref,
                      w_out_ref, b_out_ref,
                      act_ref, h_final_ref,
                      pre_ref, h_ref):
    """One sequence chunk of the Elman recurrence; weights stay VMEM-resident.

    Padded ref shapes:
      obs:(C,Dp) bf16   h0:(1,Hp) f32     w_ih:(Dp,Hp) bf16  b_h:(1,Hp) f32
      w_hh:(Hp,Hp) bf16 w_out:(Hp,Ap) bf16 b_out:(1,Ap) f32
      act:(C,Ap) f32    h_final:(1,Hp) f32
      scratch pre:(C,Hp) f32 (reused in place for the hidden states)
              h  :(1,Hp) f32 (hidden carry, persists across chunks)
    seq_len/chunk/unroll/masked are Python values baked at trace time.
    """
    c = pl.program_id(0)

    @pl.when(c == 0)
    def _():
        h_ref[...] = h0_ref[...]

    # Batched input projection for the whole chunk: one MXU pass with M = C.
    pre_ref[...] = (
        jnp.dot(obs_ref[...], w_ih_ref[...], preferred_element_type=jnp.float32)
        + b_h_ref[...]
    )

    base = c * chunk

    def body(t, h):
        pre_t = pre_ref[pl.ds(t, 1), :]                                  # (1, Hp)
        h_new = jnp.tanh(
            pre_t
            + jnp.dot(h.astype(jnp.bfloat16), w_hh_ref[...],
                      preferred_element_type=jnp.float32)
        )
        if masked:
            # Padded time rows must not advance the hidden state.
            h_new = jnp.where(base + t < seq_len, h_new, h)
        # In-place reuse: pre_ref[t] is dead after the read above, so the
        # chunk's hidden states live where the pre-activations were.
        pre_ref[pl.ds(t, 1), :] = h_new
        return h_new

    # Serial recurrence: only the (1,Hp)@(Hp,Hp) matmul + tanh sits on the
    # critical path.  Partial unroll keeps the chain visible to the scheduler
    # without code-size blowup on long chunks.
    # TODO(synk): pltpu.matmul_push_rhs / matmul_acc_lhs / matmul_pop could
    # keep W_hh resident in the MXU weight registers across the loop; kept as
    # jnp.dot for robust lowering across generations.
    h_last = lax.fori_loop(0, chunk, body, h_ref[...], unroll=unroll)
    h_ref[...] = h_last

    # Batched output projection for the chunk (lane-dense store).
    act_ref[...] = (
        jnp.dot(pre_ref[...].astype(jnp.bfloat16), w_out_ref[...],
                preferred_element_type=jnp.float32)
        + b_out_ref[...]
    )

    @pl.when(c == pl.num_programs(0) - 1)
    def _():
        h_final_ref[...] = h_ref[...]


def rnn_sequence(obs_seq, hidden, params_pad, *, obs_dim, hidden_size, act_dim,
                 max_chunk=1024, unroll=8):
    """Run the recurrent policy over a whole sequence with a single pallas_call."""
    seq_len = obs_seq.shape[0]
    dp = params_pad["w_ih"].shape[0]
    hp = params_pad["w_hh"].shape[0]
    ap = params_pad["w_out"].shape[1]

    chunk = min(_round_up(max(seq_len, 1), _SUBLANE),
                _round_up(max_chunk, _SUBLANE))
    sp = _round_up(max(seq_len, 1), chunk)         # padded seq, multiple of chunk
    num_chunks = sp // chunk
    masked = sp != seq_len

    obs_pad = jnp.zeros((sp, dp), jnp.bfloat16)
    obs_pad = obs_pad.at[:seq_len, :obs_dim].set(obs_seq.astype(jnp.bfloat16))
    h0_pad = jnp.zeros((1, hp), jnp.float32)
    h0_pad = h0_pad.at[0, :hidden_size].set(hidden.astype(jnp.float32))

    kernel = functools.partial(_rnn_chunk_kernel, seq_len, chunk, unroll, masked)

    grid_spec = pltpu.PrefetchScalarGridSpec(
        num_scalar_prefetch=0,
        grid=(num_chunks,),
        in_specs=[
            pl.BlockSpec((chunk, dp), lambda c: (c, 0)),   # obs: streamed per chunk
            pl.BlockSpec((1, hp), lambda c: (0, 0)),       # h0: resident
            pl.BlockSpec((dp, hp), lambda c: (0, 0)),      # w_ih: resident
            pl.BlockSpec((1, hp), lambda c: (0, 0)),       # b_h: resident
            pl.BlockSpec((hp, hp), lambda c: (0, 0)),      # w_hh: resident
            pl.BlockSpec((hp, ap), lambda c: (0, 0)),      # w_out: resident
            pl.BlockSpec((1, ap), lambda c: (0, 0)),       # b_out: resident
        ],
        out_specs=(
            pl.BlockSpec((chunk, ap), lambda c: (c, 0)),   # act: streamed per chunk
            pl.BlockSpec((1, hp), lambda c: (0, 0)),       # h_final: resident
        ),
        scratch_shapes=[
            pltpu.VMEM((chunk, hp), jnp.float32),   # pre-activations / hidden (in place)
            pltpu.VMEM((1, hp), jnp.float32),       # hidden carry across chunks
        ],
    )

    act_pad, h_final_pad = pl.pallas_call(
        kernel,
        out_shape=(
            jax.ShapeDtypeStruct((sp, ap), jnp.float32),
            jax.ShapeDtypeStruct((1, hp), jnp.float32),
        ),
        grid_spec=grid_spec,
        input_output_aliases={1: 1},   # h0 buffer -> h_final buffer
        compiler_params=pltpu.CompilerParams(
            dimension_semantics=("arbitrary",)),   # serial time recursion
    )(obs_pad, h0_pad,
      params_pad["w_ih"], params_pad["b_h"], params_pad["w_hh"],
      params_pad["w_out"], params_pad["b_out"])

    return act_pad[:seq_len, :act_dim], h_final_pad[0, :hidden_size]


def _make_run(obs_dim, hidden_size, act_dim, max_chunk=1024):
    return jax.jit(functools.partial(
        rnn_sequence, obs_dim=obs_dim, hidden_size=hidden_size,
        act_dim=act_dim, max_chunk=max_chunk))


def _pad2(x, rows, cols, dtype):
    out = jnp.zeros((rows, cols), dtype)
    return out.at[: x.shape[0], : x.shape[1]].set(x.astype(dtype))


class StatefulRecurrentNetwork:
    """JAX/Pallas port of Pyrado's StatefulRecurrentNetwork wrapper.

    Stores the hidden state internally; `forward(inp)` returns only the action
    and updates the stored hidden state (mirroring the register_buffer copy).
    `forward_sequence(obs_seq)` fuses a whole rollout into one kernel launch
    and is numerically identical to calling `forward` row by row.

    Note: forward() mutates a Python attribute, so it must not be called from
    inside an outer jit/scan (same constraint as the torch buffer copy).
    """
    # TODO(synk): torch.jit.script / trace_module have no Pallas equivalent;
    # the "scripted" wrapper is a plain Python class around jitted Pallas calls.

    def __init__(self, input_size, output_size, hidden_size, key):
        self.input_size = int(input_size)
        self.output_size = int(output_size)
        self._hidden_size = int(hidden_size)

        k = jax.random.split(key, 6)
        scale = 0.1
        # Weights kept as (in, out) so the kernel computes x @ W.
        self.params = {
            "w_ih": scale * jax.random.normal(k[0], (input_size, hidden_size), jnp.float32),
            "b_ih": scale * jax.random.normal(k[1], (1, hidden_size), jnp.float32),
            "w_hh": scale * jax.random.normal(k[2], (hidden_size, hidden_size), jnp.float32),
            "b_hh": scale * jax.random.normal(k[3], (1, hidden_size), jnp.float32),
            "w_out": scale * jax.random.normal(k[4], (hidden_size, output_size), jnp.float32),
            "b_out": scale * jax.random.normal(k[5], (1, output_size), jnp.float32),
        }

        # Lane-padded parameters for the kernel.  Zero-padded rows/cols are
        # load-bearing: they keep padded hidden lanes exactly zero through the
        # recursion (tanh(0) = 0).  Weights are bf16 (fp32 MXU accumulation);
        # biases stay fp32; b_ih + b_hh folded into one bias.
        dp = _round_up(self.input_size, _LANE)
        hp = _round_up(self._hidden_size, _LANE)
        ap = _round_up(self.output_size, _LANE)
        self.params_pad = {
            "w_ih": _pad2(self.params["w_ih"], dp, hp, jnp.bfloat16),
            "b_h": _pad2(self.params["b_ih"] + self.params["b_hh"], 1, hp, jnp.float32),
            "w_hh": _pad2(self.params["w_hh"], hp, hp, jnp.bfloat16),
            "w_out": _pad2(self.params["w_out"], hp, ap, jnp.bfloat16),
            "b_out": _pad2(self.params["b_out"], 1, ap, jnp.float32),
        }

        self.hidden = self.init_hidden()
        self._run = _make_run(self.input_size, self._hidden_size, self.output_size)

    @property
    def hidden_size(self):
        return self._hidden_size

    def init_hidden(self):
        return jnp.zeros((self._hidden_size,), jnp.float32)

    def reset(self):
        """Reset the policy's internal state."""
        self.hidden = self.init_hidden()

    def forward(self, inp):
        """One policy step against the stored hidden state (returns the action)."""
        acts, hid = self._run(inp.reshape(1, self.input_size), self.hidden, self.params_pad)
        self.hidden = hid  # buffer copy: hidden.data.copy_(hid.data)
        return acts[0]

    __call__ = forward

    def forward_sequence(self, obs_seq):
        """Fused multi-step forward; equivalent to calling forward() per row."""
        acts, hid = self._run(obs_seq, self.hidden, self.params_pad)
        self.hidden = hid
        return acts


def _reference_sequence(obs_seq, hidden, params):
    """Pure-JAX reference.

    Uses the same bf16-quantized weights / operands as the kernel (with fp32
    accumulation), so residual differences are accumulation order only.
    """
    bf = lambda x: x.astype(jnp.bfloat16).astype(jnp.float32)
    w_ih, w_hh, w_out = bf(params["w_ih"]), bf(params["w_hh"]), bf(params["w_out"])
    b_h = (params["b_ih"] + params["b_hh"]).astype(jnp.float32)
    b_out = params["b_out"].astype(jnp.float32)
    obs_q = bf(obs_seq)

    def step(h, o):
        pre = o[None, :] @ w_ih + b_h + bf(h)[None, :] @ w_hh
        h_new = jnp.tanh(pre)[0]
        act = bf(h_new)[None, :] @ w_out + b_out
        return h_new, act[0]

    h_final, acts = lax.scan(step, hidden, obs_q)
    return acts, h_final


if __name__ == "__main__":
    obs_dim, act_dim, hidden_size, seq_len = 16, 4, 32, 8

    key = jax.random.PRNGKey(0)
    net_key, obs_key, obs_key2 = jax.random.split(key, 3)

    net = StatefulRecurrentNetwork(obs_dim, act_dim, hidden_size, net_key)
    obs_seq = jax.random.normal(obs_key, (seq_len, obs_dim), jnp.float32)

    ref_acts, ref_hidden = _reference_sequence(obs_seq, net.init_hidden(), net.params)

    # 1) Fused whole-sequence path: one pallas_call, weights DMA'd once.
    net.reset()
    acts = net.forward_sequence(obs_seq)
    jax.block_until_ready(acts)
    jax.block_until_ready(net.hidden)
    assert acts.shape == (seq_len, act_dim)
    assert net.hidden.shape == (hidden_size,)
    err_seq = max(float(jnp.max(jnp.abs(acts - ref_acts))),
                  float(jnp.max(jnp.abs(net.hidden - ref_hidden))))

    # 2) Stateful per-step path (original module semantics), same kernel.
    net.reset()
    step_err = 0.0
    out = None
    for t in range(seq_len):
        out = net(obs_seq[t])
        step_err = max(step_err, float(jnp.max(jnp.abs(out - ref_acts[t]))))
    jax.block_until_ready(out)
    step_err = max(step_err, float(jnp.max(jnp.abs(net.hidden - ref_hidden))))
    assert out.shape == (act_dim,)

    # 3) Chunked-grid path: multiple sequence chunks + ragged last chunk.
    seq_len_long = 21
    obs_long = jax.random.normal(obs_key2, (seq_len_long, obs_dim), jnp.float32)
    ref_acts_l, ref_hidden_l = _reference_sequence(obs_long, net.init_hidden(), net.params)
    run_chunked = _make_run(obs_dim, hidden_size, act_dim, max_chunk=8)
    acts_l, hid_l = run_chunked(obs_long, net.init_hidden(), net.params_pad)
    jax.block_until_ready(acts_l)
    assert acts_l.shape == (seq_len_long, act_dim)
    err_chunk = max(float(jnp.max(jnp.abs(acts_l - ref_acts_l))),
                    float(jnp.max(jnp.abs(hid_l - ref_hidden_l))))

    tol = 1e-3  # kernel and reference share bf16 operands; residual = accum order
    assert err_seq < tol, f"sequence path mismatch vs reference: {err_seq}"
    assert step_err < tol, f"stateful path mismatch vs reference: {step_err}"
    assert err_chunk < tol, f"chunked path mismatch vs reference: {err_chunk}"

    net.reset()
    assert float(jnp.max(jnp.abs(net.hidden))) == 0.0

    print("KERNEL_OK")
</pallas_src>

<mosaic_0001>
module attributes {stable_mosaic.version = 11 : i64} {
  func.func @_rnn_chunk_kernel(%arg0: i32, %arg1: memref<8x128xbf16, #tpu.memory_space<vmem>>, %arg2: memref<1x128xf32, #tpu.memory_space<vmem>>, %arg3: memref<128x128xbf16, #tpu.memory_space<vmem>>, %arg4: memref<1x128xf32, #tpu.memory_space<vmem>>, %arg5: memref<128x128xbf16, #tpu.memory_space<vmem>>, %arg6: memref<128x128xbf16, #tpu.memory_space<vmem>>, %arg7: memref<1x128xf32, #tpu.memory_space<vmem>>, %arg8: memref<8x128xf32, #tpu.memory_space<vmem>>, %arg9: memref<1x128xf32, #tpu.memory_space<vmem>>, %arg10: memref<8x128xf32, #tpu.memory_space<vmem>>, %arg11: memref<1x128xf32, #tpu.memory_space<vmem>>) attributes {dimension_semantics = [#tpu.dimension_semantics<arbitrary>], iteration_bounds = array<i64: 1>, scalar_prefetch = 0 : i64, scratch_operands = 2 : i64, tpu.core_type = #tpu.core_type<tc>, window_params = [{transform_indices = @transform_0, window_bounds = array<i64: 8, 128>}, {pipeline_mode = #tpu.pipeline_mode<synchronous>, transform_indices = @transform_1, window_bounds = array<i64: 1, 128>}, {pipeline_mode = #tpu.pipeline_mode<synchronous>, transform_indices = @transform_2, window_bounds = array<i64: 128, 128>}, {pipeline_mode = #tpu.pipeline_mode<synchronous>, transform_indices = @transform_3, window_bounds = array<i64: 1, 128>}, {pipeline_mode = #tpu.pipeline_mode<synchronous>, transform_indices = @transform_4, window_bounds = array<i64: 128, 128>}, {pipeline_mode = #tpu.pipeline_mode<synchronous>, transform_indices = @transform_5, window_bounds = array<i64: 128, 128>}, {pipeline_mode = #tpu.pipeline_mode<synchronous>, transform_indices = @transform_6, window_bounds = array<i64: 1, 128>}, {transform_indices = @transform_7, window_bounds = array<i64: 8, 128>}, {pipeline_mode = #tpu.pipeline_mode<synchronous>, transform_indices = @transform_8, window_bounds = array<i64: 1, 128>}]} {
    %c0_i32 = arith.constant 0 : i32
    %0 = arith.cmpi eq, %arg0, %c0_i32 : i32
    %1 = arith.extui %0 : i1 to i32
    %c0_i32_0 = arith.constant 0 : i32
    %2 = arith.cmpi ne, %1, %c0_i32_0 : i32
    scf.if %2 {
      %c0_64 = arith.constant 0 : index
      %c0_65 = arith.constant 0 : index
      %95 = vector.load %arg2[%c0_64, %c0_65] : memref<1x128xf32, #tpu.memory_space<vmem>>, vector<1x128xf32>
      %c0_66 = arith.constant 0 : index
      %c0_67 = arith.constant 0 : index
      %96 = vector.load %arg11[%c0_66, %c0_67] : memref<1x128xf32, #tpu.memory_space<vmem>>, vector<1x128xf32>
      tpu.vector_store %arg11[%c0_66, %c0_67], %95 {strides = array<i32>} : memref<1x128xf32, #tpu.memory_space<vmem>>, vector<1x128xf32>,
    } else {
    }
    %c0 = arith.constant 0 : index
    %c0_1 = arith.constant 0 : index
    %3 = vector.load %arg1[%c0, %c0_1] : memref<8x128xbf16, #tpu.memory_space<vmem>>, vector<8x128xbf16>
    %c0_2 = arith.constant 0 : index
    %c0_3 = arith.constant 0 : index
    %4 = vector.load %arg3[%c0_2, %c0_3] : memref<128x128xbf16, #tpu.memory_space<vmem>>, vector<128x128xbf16>
    %cst = arith.constant dense<0.000000e+00> : vector<8x128xf32>
    %5 = tpu.matmul %3, %4, %cst {dimension_numbers = #tpu.dot_dimension_numbers<[1], [0], [0], [1], [0, 0, 1, 1], [], []>} : vector<8x128xbf16>, vector<128x128xbf16>, vector<8x128xf32> -> vector<8x128xf32>
    %c0_4 = arith.constant 0 : index
    %c0_5 = arith.constant 0 : index
    %6 = vector.load %arg4[%c0_4, %c0_5] : memref<1x128xf32, #tpu.memory_space<vmem>>, vector<1x128xf32>
    %7 = vector.broadcast %6 : vector<1x128xf32> to vector<8x128xf32>
    %8 = arith.addf %5, %7 : vector<8x128xf32>
    %c0_6 = arith.constant 0 : index
    %c0_7 = arith.constant 0 : index
    %9 = vector.load %arg10[%c0_6, %c0_7] : memref<8x128xf32, #tpu.memory_space<vmem>>, vector<8x128xf32>
    tpu.vector_store %arg10[%c0_6, %c0_7], %8 {strides = array<i32>} : memref<8x128xf32, #tpu.memory_space<vmem>>, vector<8x128xf32>,
    %c0_8 = arith.constant 0 : index
    %c0_9 = arith.constant 0 : index
    %10 = vector.load %arg11[%c0_8, %c0_9] : memref<1x128xf32, #tpu.memory_space<vmem>>, vector<1x128xf32>
    %c0_i32_10 = arith.constant 0 : i32
    %11 = arith.index_cast %c0_i32_10 : i32 to index
    %c0_11 = arith.constant 0 : index
    %12 = vector.load %arg10[%11, %c0_11] : memref<8x128xf32, #tpu.memory_space<vmem>>, vector<1x128xf32>
    %13 = arith.truncf %10 : vector<1x128xf32> to vector<1x128xbf16>
    %c0_12 = arith.constant 0 : index
    %c0_13 = arith.constant 0 : index
    %14 = vector.load %arg5[%c0_12, %c0_13] : memref<128x128xbf16, #tpu.memory_space<vmem>>, vector<128x128xbf16>
    %cst_14 = arith.constant dense<0.000000e+00> : vector<1x128xf32>
    %15 = tpu.matmul %13, %14, %cst_14 {dimension_numbers = #tpu.dot_dimension_numbers<[1], [0], [0], [1], [0, 0, 1, 1], [], []>} : vector<1x128xbf16>, vector<128x128xbf16>, vector<1x128xf32> -> vector<1x128xf32>
    %16 = arith.addf %12, %15 : vector<1x128xf32>
    %17 = math.tanh %16 : vector<1x128xf32>
    %18 = arith.index_cast %c0_i32_10 : i32 to index
    %c0_15 = arith.constant 0 : index
    %19 = vector.load %arg10[%18, %c0_15] : memref<8x128xf32, #tpu.memory_space<vmem>>, vector<1x128xf32>
    tpu.vector_store %arg10[%18, %c0_15], %17 {strides = array<i32>} : memref<8x128xf32, #tpu.memory_space<vmem>>, vector<1x128xf32>,
    %c1_i32 = arith.constant 1 : i32
    %20 = arith.index_cast %c1_i32 : i32 to index
    %c0_16 = arith.constant 0 : index
    %21 = vector.load %arg10[%20, %c0_16] : memref<8x128xf32, #tpu.memory_space<vmem>>, vector<1x128xf32>
    %22 = arith.truncf %17 : vector<1x128xf32> to vector<1x128xbf16>
    %c0_17 = arith.constant 0 : index
    %c0_18 = arith.constant 0 : index
    %23 = vector.load %arg5[%c0_17, %c0_18] : memref<128x128xbf16, #tpu.memory_space<vmem>>, vector<128x128xbf16>
    %cst_19 = arith.constant dense<0.000000e+00> : vector<1x128xf32>
    %24 = tpu.matmul %22, %23, %cst_19 {dimension_numbers = #tpu.dot_dimension_numbers<[1], [0], [0], [1], [0, 0, 1, 1], [], []>} : vector<1x128xbf16>, vector<128x128xbf16>, vector<1x128xf32> -> vector<1x128xf32>
    %25 = arith.addf %21, %24 : vector<1x128xf32>
    %26 = math.tanh %25 : vector<1x128xf32>
    %27 = arith.index_cast %c1_i32 : i32 to index
    %c0_20 = arith.constant 0 : index
    %28 = vector.load %arg10[%27, %c0_20] : memref<8x128xf32, #tpu.memory_space<vmem>>, vector<1x128xf32>
    tpu.vector_store %arg10[%27, %c0_20], %26 {strides = array<i32>} : memref<8x128xf32, #tpu.memory_space<vmem>>, vector<1x128xf32>,
    %c2_i32 = arith.constant 2 : i32
    %29 = arith.index_cast %c2_i32 : i32 to index
    %c0_21 = arith.constant 0 : index
    %30 = vector.load %arg10[%29, %c0_21] : memref<8x128xf32, #tpu.memory_space<vmem>>, vector<1x128xf32>
    %31 = arith.truncf %26 : vector<1x128xf32> to vector<1x128xbf16>
    %c0_22 = arith.constant 0 : index
    %c0_23 = arith.constant 0 : index
    %32 = vector.load %arg5[%c0_22, %c0_23] : memref<128x128xbf16, #tpu.memory_space<vmem>>, vector<128x128xbf16>
    %cst_24 = arith.constant dense<0.000000e+00> : vector<1x128xf32>
    %33 = tpu.matmul %31, %32, %cst_24 {dimension_numbers = #tpu.dot_dimension_numbers<[1], [0], [0], [1], [0, 0, 1, 1], [], []>} : vector<1x128xbf16>, vector<128x128xbf16>, vector<1x128xf32> -> vector<1x128xf32>
    %34 = arith.addf %30, %33 : vector<1x128xf32>
    %35 = math.tanh %34 : vector<1x128xf32>
    %36 = arith.index_cast %c2_i32 : i32 to index
    %c0_25 = arith.constant 0 : index
    %37 = vector.load %arg10[%36, %c0_25] : memref<8x128xf32, #tpu.memory_space<vmem>>, vector<1x128xf32>
    tpu.vector_store %arg10[%36, %c0_25], %35 {strides = array<i32>} : memref<8x128xf32, #tpu.memory_space<vmem>>, vector<1x128xf32>,
    %c3_i32 = arith.constant 3 : i32
    %38 = arith.index_cast %c3_i32 : i32 to index
    %c0_26 = arith.constant 0 : index
    %39 = vector.load %arg10[%38, %c0_26] : memref<8x128xf32, #tpu.memory_space<vmem>>, vector<1x128xf32>
    %40 = arith.truncf %35 : vector<1x128xf32> to vector<1x128xbf16>
    %c0_27 = arith.constant 0 : index
    %c0_28 = arith.constant 0 : index
    %41 = vector.load %arg5[%c0_27, %c0_28] : memref<128x128xbf16, #tpu.memory_space<vmem>>, vector<128x128xbf16>
    %cst_29 = arith.constant dense<0.000000e+00> : vector<1x128xf32>
    %42 = tpu.matmul %40, %41, %cst_29 {dimension_numbers = #tpu.dot_dimension_numbers<[1], [0], [0], [1], [0, 0, 1, 1], [], []>} : vector<1x128xbf16>, vector<128x128xbf16>, vector<1x128xf32> -> vector<1x128xf32>
    %43 = arith.addf %39, %42 : vector<1x128xf32>
    %44 = math.tanh %43 : vector<1x128xf32>
    %45 = arith.index_cast %c3_i32 : i32 to index
    %c0_30 = arith.constant 0 : index
    %46 = vector.load %arg10[%45, %c0_30] : memref<8x128xf32, #tpu.memory_space<vmem>>, vector<1x128xf32>
    tpu.vector_store %arg10[%45, %c0_30], %44 {strides = array<i32>} : memref<8x128xf32, #tpu.memory_space<vmem>>, vector<1x128xf32>,
    %c4_i32 = arith.constant 4 : i32
    %47 = arith.index_cast %c4_i32 : i32 to index
    %c0_31 = arith.constant 0 : index
    %48 = vector.load %arg10[%47, %c0_31] : memref<8x128xf32, #tpu.memory_space<vmem>>, vector<1x128xf32>
    %49 = arith.truncf %44 : vector<1x128xf32> to vector<1x128xbf16>
    %c0_32 = arith.constant 0 : index
    %c0_33 = arith.constant 0 : index
    %50 = vector.load %arg5[%c0_32, %c0_33] : memref<128x128xbf16, #tpu.memory_space<vmem>>, vector<128x128xbf16>
    %cst_34 = arith.constant dense<0.000000e+00> : vector<1x128xf32>
    %51 = tpu.matmul %49, %50, %cst_34 {dimension_numbers = #tpu.dot_dimension_numbers<[1], [0], [0], [1], [0, 0, 1, 1], [], []>} : vector<1x128xbf16>, vector<128x128xbf16>, vector<1x128xf32> -> vector<1x128xf32>
    %52 = arith.addf %48, %51 : vector<1x128xf32>
    %53 = math.tanh %52 : vector<1x128xf32>
    %54 = arith.index_cast %c4_i32 : i32 to index
    %c0_35 = arith.constant 0 : index
    %55 = vector.load %arg10[%54, %c0_35] : memref<8x128xf32, #tpu.memory_space<vmem>>, vector<1x128xf32>
    tpu.vector_store %arg10[%54, %c0_35], %53 {strides = array<i32>} : memref<8x128xf32, #tpu.memory_space<vmem>>, vector<1x128xf32>,
    %c5_i32 = arith.constant 5 : i32
    %56 = arith.index_cast %c5_i32 : i32 to index
    %c0_36 = arith.constant 0 : index
    %57 = vector.load %arg10[%56, %c0_36] : memref<8x128xf32, #tpu.memory_space<vmem>>, vector<1x128xf32>
    %58 = arith.truncf %53 : vector<1x128xf32> to vector<1x128xbf16>
    %c0_37 = arith.constant 0 : index
    %c0_38 = arith.constant 0 : index
    %59 = vector.load %arg5[%c0_37, %c0_38] : memref<128x128xbf16, #tpu.memory_space<vmem>>, vector<128x128xbf16>
    %cst_39 = arith.constant dense<0.000000e+00> : vector<1x128xf32>
    %60 = tpu.matmul %58, %59, %cst_39 {dimension_numbers = #tpu.dot_dimension_numbers<[1], [0], [0], [1], [0, 0, 1, 1], [], []>} : vector<1x128xbf16>, vector<128x128xbf16>, vector<1x128xf32> -> vector<1x128xf32>
    %61 = arith.addf %57, %60 : vector<1x128xf32>
    %62 = math.tanh %61 : vector<1x128xf32>
    %63 = arith.index_cast %c5_i32 : i32 to index
    %c0_40 = arith.constant 0 : index
    %64 = vector.load %arg10[%63, %c0_40] : memref<8x128xf32, #tpu.memory_space<vmem>>, vector<1x128xf32>
    tpu.vector_store %arg10[%63, %c0_40], %62 {strides = array<i32>} : memref<8x128xf32, #tpu.memory_space<vmem>>, vector<1x128xf32>,
    %c6_i32 = arith.constant 6 : i32
    %65 = arith.index_cast %c6_i32 : i32 to index
    %c0_41 = arith.constant 0 : index
    %66 = vector.load %arg10[%65, %c0_41] : memref<8x128xf32, #tpu.memory_space<vmem>>, vector<1x128xf32>
    %67 = arith.truncf %62 : vector<1x128xf32> to vector<1x128xbf16>
    %c0_42 = arith.constant 0 : index
    %c0_43 = arith.constant 0 : index
    %68 = vector.load %arg5[%c0_42, %c0_43] : memref<128x128xbf16, #tpu.memory_space<vmem>>, vector<128x128xbf16>
    %cst_44 = arith.constant dense<0.000000e+00> : vector<1x128xf32>
    %69 = tpu.matmul %67, %68, %cst_44 {dimension_numbers = #tpu.dot_dimension_numbers<[1], [0], [0], [1], [0, 0, 1, 1], [], []>} : vector<1x128xbf16>, vector<128x128xbf16>, vector<1x128xf32> -> vector<1x128xf32>
    %70 = arith.addf %66, %69 : vector<1x128xf32>
    %71 = math.tanh %70 : vector<1x128xf32>
    %72 = arith.index_cast %c6_i32 : i32 to index
    %c0_45 = arith.constant 0 : index
    %73 = vector.load %arg10[%72, %c0_45] : memref<8x128xf32, #tpu.memory_space<vmem>>, vector<1x128xf32>
    tpu.vector_store %arg10[%72, %c0_45], %71 {strides = array<i32>} : memref<8x128xf32, #tpu.memory_space<vmem>>, vector<1x128xf32>,
    %c7_i32 = arith.constant 7 : i32
    %74 = arith.index_cast %c7_i32 : i32 to index
    %c0_46 = arith.constant 0 : index
    %75 = vector.load %arg10[%74, %c0_46] : memref<8x128xf32, #tpu.memory_space<vmem>>, vector<1x128xf32>
    %76 = arith.truncf %71 : vector<1x128xf32> to vector<1x128xbf16>
    %c0_47 = arith.constant 0 : index
    %c0_48 = arith.constant 0 : index
    %77 = vector.load %arg5[%c0_47, %c0_48] : memref<128x128xbf16, #tpu.memory_space<vmem>>, vector<128x128xbf16>
    %cst_49 = arith.constant dense<0.000000e+00> : vector<1x128xf32>
    %78 = tpu.matmul %76, %77, %cst_49 {dimension_numbers = #tpu.dot_dimension_numbers<[1], [0], [0], [1], [0, 0, 1, 1], [], []>} : vector<1x128xbf16>, vector<128x128xbf16>, vector<1x128xf32> -> vector<1x128xf32>
    %79 = arith.addf %75, %78 : vector<1x128xf32>
    %80 = math.tanh %79 : vector<1x128xf32>
    %81 = arith.index_cast %c7_i32 : i32 to index
    %c0_50 = arith.constant 0 : index
    %82 = vector.load %arg10[%81, %c0_50] : memref<8x128xf32, #tpu.memory_space<vmem>>, vector<1x128xf32>
    tpu.vector_store %arg10[%81, %c0_50], %80 {strides = array<i32>} : memref<8x128xf32, #tpu.memory_space<vmem>>, vector<1x128xf32>,
    %c8_i32 = arith.constant 8 : i32
    %c0_51 = arith.constant 0 : index
    %c0_52 = arith.constant 0 : index
    %83 = vector.load %arg11[%c0_51, %c0_52] : memref<1x128xf32, #tpu.memory_space<vmem>>, vector<1x128xf32>
    tpu.vector_store %arg11[%c0_51, %c0_52], %80 {strides = array<i32>} : memref<1x128xf32, #tpu.memory_space<vmem>>, vector<1x128xf32>,
    %c0_53 = arith.constant 0 : index
    %c0_54 = arith.constant 0 : index
    %84 = vector.load %arg10[%c0_53, %c0_54] : memref<8x128xf32, #tpu.memory_space<vmem>>, vector<8x128xf32>
    %85 = arith.truncf %84 : vector<8x128xf32> to vector<8x128xbf16>
    %c0_55 = arith.constant 0 : index
    %c0_56 = arith.constant 0 : index
    %86 = vector.load %arg6[%c0_55, %c0_56] : memref<128x128xbf16, #tpu.memory_space<vmem>>, vector<128x128xbf16>
    %cst_57 = arith.constant dense<0.000000e+00> : vector<8x128xf32>
    %87 = tpu.matmul %85, %86, %cst_57 {dimension_numbers = #tpu.dot_dimension_numbers<[1], [0], [0], [1], [0, 0, 1, 1], [], []>} : vector<8x128xbf16>, vector<128x128xbf16>, vector<8x128xf32> -> vector<8x128xf32>
    %c0_58 = arith.constant 0 : index
    %c0_59 = arith.constant 0 : index
    %88 = vector.load %arg7[%c0_58, %c0_59] : memref<1x128xf32, #tpu.memory_space<vmem>>, vector<1x128xf32>
    %89 = vector.broadcast %88 : vector<1x128xf32> to vector<8x128xf32>
    %90 = arith.addf %87, %89 : vector<8x128xf32>
    %c0_60 = arith.constant 0 : index
    %c0_61 = arith.constant 0 : index
    %91 = vector.load %arg8[%c0_60, %c0_61] : memref<8x128xf32, #tpu.memory_space<vmem>>, vector<8x128xf32>
    tpu.vector_store %arg8[%c0_60, %c0_61], %90 {strides = array<i32>} : memref<8x128xf32, #tpu.memory_space<vmem>>, vector<8x128xf32>,
    %c0_i32_62 = arith.constant 0 : i32
    %92 = arith.cmpi eq, %arg0, %c0_i32_62 : i32
    %93 = arith.extui %92 : i1 to i32
    %c0_i32_63 = arith.constant 0 : i32
    %94 = arith.cmpi ne, %93, %c0_i32_63 : i32
    scf.if %94 {
      %c0_64 = arith.constant 0 : index
      %c0_65 = arith.constant 0 : index
      %95 = vector.load %arg11[%c0_64, %c0_65] : memref<1x128xf32, #tpu.memory_space<vmem>>, vector<1x128xf32>
      %c0_66 = arith.constant 0 : index
      %c0_67 = arith.constant 0 : index
      %96 = vector.load %arg9[%c0_66, %c0_67] : memref<1x128xf32, #tpu.memory_space<vmem>>, vector<1x128xf32>
      tpu.vector_store %arg9[%c0_66, %c0_67], %95 {strides = array<i32>} : memref<1x128xf32, #tpu.memory_space<vmem>>, vector<1x128xf32>,
    } else {
    }
    return
  }
  func.func @transform_0(%arg0: i32) -> (i32, i32) {
    %c0_i32 = arith.constant 0 : i32
    %c0_i32_0 = arith.constant 0 : i32
    return %arg0, %c0_i32 : i32, i32
  }
  func.func @transform_1(%arg0: i32) -> (i32, i32) {
    %c0_i32 = arith.constant 0 : i32
    %c0_i32_0 = arith.constant 0 : i32
    %c0_i32_1 = arith.constant 0 : i32
    return %c0_i32, %c0_i32_0 : i32, i32
  }
  func.func @transform_2(%arg0: i32) -> (i32, i32) {
    %c0_i32 = arith.constant 0 : i32
    %c0_i32_0 = arith.constant 0 : i32
    %c0_i32_1 = arith.constant 0 : i32
    return %c0_i32, %c0_i32_0 : i32, i32
  }
  func.func @transform_3(%arg0: i32) -> (i32, i32) {
    %c0_i32 = arith.constant 0 : i32
    %c0_i32_0 = arith.constant 0 : i32
    %c0_i32_1 = arith.constant 0 : i32
    return %c0_i32, %c0_i32_0 : i32, i32
  }
  func.func @transform_4(%arg0: i32) -> (i32, i32) {
    %c0_i32 = arith.constant 0 : i32
    %c0_i32_0 = arith.constant 0 : i32
    %c0_i32_1 = arith.constant 0 : i32
    return %c0_i32, %c0_i32_0 : i32, i32
  }
  func.func @transform_5(%arg0: i32) -> (i32, i32) {
    %c0_i32 = arith.constant 0 : i32
    %c0_i32_0 = arith.constant 0 : i32
    %c0_i32_1 = arith.constant 0 : i32
    return %c0_i32, %c0_i32_0 : i32, i32
  }
  func.func @transform_6(%arg0: i32) -> (i32, i32) {
    %c0_i32 = arith.constant 0 : i32
    %c0_i32_0 = arith.constant 0 : i32
    %c0_i32_1 = arith.constant 0 : i32
    return %c0_i32, %c0_i32_0 : i32, i32
  }
  func.func @transform_7(%arg0: i32) -> (i32, i32) {
    %c0_i32 = arith.constant 0 : i32
    %c0_i32_0 = arith.constant 0 : i32
    return %arg0, %c0_i32 : i32, i32
  }
  func.func @transform_8(%arg0: i32) -> (i32, i32) {
    %c0_i32 = arith.constant 0 : i32
    %c0_i32_0 = arith.constant 0 : i32
    %c0_i32_1 = arith.constant 0 : i32
    return %c0_i32, %c0_i32_0 : i32, i32
  }
}

</mosaic_0001>

<llo_original>
// kernel: rnn_sequence.1
$region0: #{rnn_sequence.1}
  #allocation0 [shape = 'u32[]', space=smem, size = 0x4, offset = 0x4, fixed_abs, tag = 'smem constant byte address 0x4 - core index']
  #allocation1 [shape = 'u32[144,128]{1,0:T(1,128)}', space=vmem, size = 0x12000, scoped, tag = 'internal scratch']
  #allocation2 [shape = 'f32[8,128]{1,0:T(8,128)}', space=vmem, size = 0x1000, scoped, tag = 'scratch operand']
  #allocation3 [shape = 'f32[1,128]{1,0:T(1,128)}', space=vmem, size = 0x200, scoped, tag = 'scratch operand']
  %s0 = inlined_call_operand.vmem [shape: bf16[8,128], index: 0, kind: input, shape index: {}]
  %s1 = inlined_call_operand.vmem [shape: f32[1,128], index: 1, kind: input, shape index: {}, may-alias: {1,8}]
  %s2 = inlined_call_operand.hbm [shape: bf16[128,128], index: 2, kind: input, shape index: {}]
  %s3 = inlined_call_operand.vmem [shape: f32[1,128], index: 3, kind: input, shape index: {}]
  %s4 = inlined_call_operand.hbm [shape: bf16[128,128], index: 4, kind: input, shape index: {}]
  %s5 = inlined_call_operand.hbm [shape: bf16[128,128], index: 5, kind: input, shape index: {}]
  %s6 = inlined_call_operand.vmem [shape: f32[1,128], index: 6, kind: input, shape index: {}]
  %s7 = inlined_call_operand.vmem [shape: f32[8,128], index: 7, kind: output, shape index: {0}]
  %s8 = inlined_call_operand.vmem [shape: f32[1,128], index: 8, kind: output, shape index: {1}, may-alias: {1,8}]
  %9 = xla_tuple %s7, %s8
  %s10 = sld [smem:[#allocation0]]
  $region66: #{rnn_sequence.1} parent=0
    _
  %s12 = ssub.s32 1, %s10
  %s13 = scalar_select 0, %s12, %s10
  $region1: #{rnn_sequence.1} parent=0
    #allocation4 [shape = 'u8[32768]{0}', space=vmem, size = 0x8000, scoped, tag = 'input window, operand 2, single buffered']
    #allocation5 [shape = 's32[1]{0}', space=sflag, size = 0x4, scoped, tag = 'scoped memory for rnn_sequence.1']
    #allocation6 [shape = 'u8[32768]{0}', space=vmem, size = 0x8000, scoped, tag = 'input window, operand 4, single buffered']
    #allocation7 [shape = 's32[1]{0}', space=sflag, size = 0x4, scoped, tag = 'scoped memory for rnn_sequence.1']
    #allocation8 [shape = 'u8[32768]{0}', space=vmem, size = 0x8000, scoped, tag = 'input window, operand 5, single buffered']
    %14 = vsyncpa [#allocation5], 0
    %15 = vsyncpa [#allocation7], 0
    // Predicated region
    $region2: #{rnn_sequence.1} parent=1 // pred_check
      _
    $region3: #{rnn_sequence.1} parent=1 // pred_check_branch
      %17 = sbr.rel (0) target = $region5
    $region4: #{rnn_sequence.1} parent=1 // pred_region
      _
    $region5: #{rnn_sequence.1} parent=1 // pred_fallthru
      _
    // Predicated region
    $region6: #{rnn_sequence.1} parent=1 // pred_check
      _
    $region7: #{rnn_sequence.1} parent=1 // pred_check_branch
      %19 = sbr.rel (0) target = $region9
    $region8: #{rnn_sequence.1} parent=1 // pred_region
      _
    $region9: #{rnn_sequence.1} parent=1 // pred_fallthru
      _
    // Predicated region
    $region10: #{rnn_sequence.1} parent=1 // pred_check
      _
    $region11: #{rnn_sequence.1} parent=1 // pred_check_branch
      %21 = sbr.rel (0) target = $region13
    $region12: #{rnn_sequence.1} parent=1 // pred_region
      %s23 = ssub.s32 1024, 1024
      %24 = vsyncadd [#allocation5], %s23
      %s25 = sshll.u32 [#allocation4], 4
      %s26 = int_to_ptr.vmem [resolvable:$true] %s25
      %31 = dma.hbm_to_vmem [thread:$0]  %s2, 1024, %s26, [#allocation5], 64, 64, 4
    $region13: #{rnn_sequence.1} parent=1 // pred_fallthru
      _
    // Predicated region
    $region14: #{rnn_sequence.1} parent=1 // pred_check
      _
    $region15: #{rnn_sequence.1} parent=1 // pred_check_branch
      %33 = sbr.rel (0) target = $region17
    $region16: #{rnn_sequence.1} parent=1 // pred_region
      _
    $region17: #{rnn_sequence.1} parent=1 // pred_fallthru
      _
    // Predicated region
    $region18: #{rnn_sequence.1} parent=1 // pred_check
      _
    $region19: #{rnn_sequence.1} parent=1 // pred_check_branch
      %35 = sbr.rel (0) target = $region21
    $region20: #{rnn_sequence.1} parent=1 // pred_region
      %s37 = ssub.s32 1024, 1024
      %38 = vsyncadd [#allocation7], %s37
      %s39 = sshll.u32 [#allocation6], 4
      %s40 = int_to_ptr.vmem [resolvable:$true] %s39
      %45 = dma.hbm_to_vmem [thread:$0]  %s4, 1024, %s40, [#allocation7], 64, 64, 4
    $region21: #{rnn_sequence.1} parent=1 // pred_fallthru
      _
    // Predicated region
    $region22: #{rnn_sequence.1} parent=1 // pred_check
      _
    $region23: #{rnn_sequence.1} parent=1 // pred_check_branch
      %47 = sbr.rel (0) target = $region25
    $region24: #{rnn_sequence.1} parent=1 // pred_region
      %s49 = ssub.s32 1024, 1024
      %50 = vsyncadd [#allocation7], %s49
      %s51 = sshll.u32 [#allocation8], 4
      %s52 = int_to_ptr.vmem [resolvable:$true] %s51
      %57 = dma.hbm_to_vmem [thread:$0]  %s5, 1024, %s52, [#allocation7], 64, 64, 4
    $region25: #{rnn_sequence.1} parent=1 // pred_fallthru
      _
    // Predicated region
    $region26: #{rnn_sequence.1} parent=1 // pred_check
      _
    $region27: #{rnn_sequence.1} parent=1 // pred_check_branch
      %59 = sbr.rel (0) target = $region29
    $region28: #{rnn_sequence.1} parent=1 // pred_region
      _
    $region29: #{rnn_sequence.1} parent=1 // pred_fallthru
      _
    // Predicated region
    $region30: #{rnn_sequence.1} parent=1 // pred_check
      _
    $region31: #{rnn_sequence.1} parent=1 // pred_check_branch
      %61 = sbr.rel (0) target = $region33
    $region32: #{rnn_sequence.1} parent=1 // pred_region
      %62 = dma.done [#allocation5], 1024
    $region33: #{rnn_sequence.1} parent=1 // pred_fallthru
      _
    // Predicated region
    $region34: #{rnn_sequence.1} parent=1 // pred_check
      _
    $region35: #{rnn_sequence.1} parent=1 // pred_check_branch
      %64 = sbr.rel (0) target = $region37
    $region36: #{rnn_sequence.1} parent=1 // pred_region
      %65 = dma.done [#allocation7], 1024
    $region37: #{rnn_sequence.1} parent=1 // pred_fallthru
      _
    // Predicated region
    $region38: #{rnn_sequence.1} parent=1 // pred_check
      _
    $region39: #{rnn_sequence.1} parent=1 // pred_check_branch
      %67 = sbr.rel (0) target = $region41
    $region40: #{rnn_sequence.1} parent=1 // pred_region
      %68 = dma.done [#allocation7], 1024
    $region41: #{rnn_sequence.1} parent=1 // pred_fallthru
      _
    %p70 = scmp.eq.s32.totalorder 0, 0
    // Predicated region
    $region42: #{rnn_sequence.1} parent=1 // pred_check
      %p71 = pneg %p70
    $region43: #{rnn_sequence.1} parent=1 // pred_check_branch
      %73 = sbr.rel (%p71) target = $region45
    $region44: #{rnn_sequence.1} parent=1 // pred_region
      %v74 = vld [vmem:[%s1] sm:$0x1]
      %75 = vst [vmem:[#allocation3] sm:$0x1] %v74
    $region45: #{rnn_sequence.1} parent=1 // pred_fallthru
      _
    %v76 = vld [vmem:[%s0] sm:$0xf]
    %v77 = vld [vmem:[#allocation4] sm:$0xf]
    %v78 = vld [vmem:[#allocation4 + $0x4] sm:$0xf]
    %v79 = vld [vmem:[#allocation4 + $0x8] sm:$0xf]
    %v80 = vld [vmem:[#allocation4 + $0xc] sm:$0xf]
    %v81 = vld [vmem:[#allocation4 + $0x10] sm:$0xf]
    %v82 = vld [vmem:[#allocation4 + $0x14] sm:$0xf]
    %v83 = vld [vmem:[#allocation4 + $0x18] sm:$0xf]
    %v84 = vld [vmem:[#allocation4 + $0x1c] sm:$0xf]
    %v85 = vld [vmem:[#allocation4 + $0x20] sm:$0xf]
    %v86 = vld [vmem:[#allocation4 + $0x24] sm:$0xf]
    %v87 = vld [vmem:[#allocation4 + $0x28] sm:$0xf]
    %v88 = vld [vmem:[#allocation4 + $0x2c] sm:$0xf]
    %v89 = vld [vmem:[#allocation4 + $0x30] sm:$0xf]
    %v90 = vld [vmem:[#allocation4 + $0x34] sm:$0xf]
    %v91 = vld [vmem:[#allocation4 + $0x38] sm:$0xf]
    %v92 = vld [vmem:[#allocation4 + $0x3c] sm:$0xf]
    %v93 = vld [vmem:[%s3] sm:$0x1]
    %v95 = vlaneseq
    %v96 = vshrl.u32 %v95, 7
    %v97 = vsub.s32 0, %v96
    %v98 = vrot.slane %v93, %v97
    %v116 = vunpack.c.l.b16 %v77
    %v117 = vunpack.c.l.b16 %v78
    %v118 = vunpack.c.l.b16 %v79
    %v119 = vunpack.c.l.b16 %v80
    %v120 = vunpack.c.l.b16 %v81
    %v121 = vunpack.c.l.b16 %v82
    %v122 = vunpack.c.l.b16 %v83
    %v123 = vunpack.c.l.b16 %v84
    %v124 = vunpack.c.l.b16 %v85
    %v125 = vunpack.c.l.b16 %v86
    %v126 = vunpack.c.l.b16 %v87
    %v127 = vunpack.c.l.b16 %v88
    %v128 = vunpack.c.l.b16 %v89
    %v129 = vunpack.c.l.b16 %v90
    %v130 = vunpack.c.l.b16 %v91
    %v131 = vunpack.c.l.b16 %v92
    %v132 = vpack.c.b16 %v117, %v116
    %v133 = vpack.c.b16 %v119, %v118
    %v134 = vpack.c.b16 %v121, %v120
    %v135 = vpack.c.b16 %v123, %v122
    %v136 = vpack.c.b16 %v125, %v124
    %v137 = vpack.c.b16 %v127, %v126
    %v138 = vpack.c.b16 %v129, %v128
    %v139 = vpack.c.b16 %v131, %v130
    %148 = vmatprep.subr.bf16.mxu0 0
    %149 = vmatpush1.bf16.msra.mxu0 %v132
    %150 = vmatprep.subr.bf16.mxu0 0
    %151 = vmatpush1.bf16.msra.mxu0 %v133
    %152 = vmatprep.subr.bf16.mxu0 0
    %153 = vmatpush1.bf16.msra.mxu0 %v134
    %154 = vmatprep.subr.bf16.mxu0 0
    %155 = vmatpush1.bf16.msra.mxu0 %v135
    %156 = vmatprep.subr.bf16.mxu0 0
    %157 = vmatpush1.bf16.msra.mxu0 %v136
    %158 = vmatprep.subr.bf16.mxu0 0
    %159 = vmatpush1.bf16.msra.mxu0 %v137
    %160 = vmatprep.subr.bf16.mxu0 0
    %161 = vmatpush1.bf16.msra.mxu0 %v138
    %162 = vmatprep.subr.bf16.mxu0 0
    %163 = vmatpush1.bf16.msra.mxu0 %v139
    %164 = vmatprep.subr.bf16.mxu0 0
    %165 = vmatpush1.bf16.msra.mxu0 0
    %166 = vmatprep.subr.bf16.mxu0 0
    %167 = vmatpush1.bf16.msra.mxu0 0
    %168 = vmatprep.subr.bf16.mxu0 0
    %169 = vmatpush1.bf16.msra.mxu0 0
    %170 = vmatprep.subr.bf16.mxu0 0
    %171 = vmatpush1.bf16.msra.mxu0 0
    %172 = vmatprep.subr.bf16.mxu0 0
    %173 = vmatpush1.bf16.msra.mxu0 0
    %174 = vmatprep.subr.bf16.mxu0 0
    %175 = vmatpush1.bf16.msra.mxu0 0
    %176 = vmatprep.subr.bf16.mxu0 0
    %177 = vmatpush1.bf16.msra.mxu0 0
    %178 = vmatprep.subr.bf16.mxu0 0
    %179 = vmatpush1.bf16.msra.mxu0 0
    %180 = vmatprep.mubr.bf16.mxu0 0
    %181 = vmatmul.mubr.bf16.gmra.mrb[0].mxu0 %v76
    %v182 = vpop.f32.mrb[0].mxu0
    %v183 = vadd.f32 %v98, %v182
    %v184 = vpop.f32.mrb[0].mxu0
    %v185 = vpop.f32.mrb[0].mxu0
    %v186 = vpop.f32.mrb[0].mxu0
    %187 = vdwg.mxu0
    %188 = vst [vmem:[#allocation2] sm:$0xff] %v183
    %v189 = vld [vmem:[#allocation3] sm:$0x1]
    %v190 = vld [vmem:[#allocation2] sm:$0x1]
    %v191 = vpack.c.bf16 %v189, %v189
    %v192 = vld [vmem:[#allocation6] sm:$0xf]
    %v193 = vld [vmem:[#allocation6 + $0x4] sm:$0xf]
    %v194 = vld [vmem:[#allocation6 + $0x8] sm:$0xf]
    %v195 = vld [vmem:[#allocation6 + $0xc] sm:$0xf]
    %v196 = vld [vmem:[#allocation6 + $0x10] sm:$0xf]
    %v197 = vld [vmem:[#allocation6 + $0x14] sm:$0xf]
    %v198 = vld [vmem:[#allocation6 + $0x18] sm:$0xf]
    %v199 = vld [vmem:[#allocation6 + $0x1c] sm:$0xf]
    %v200 = vld [vmem:[#allocation6 + $0x20] sm:$0xf]
    %v201 = vld [vmem:[#allocation6 + $0x24] sm:$0xf]
    %v202 = vld [vmem:[#allocation6 + $0x28] sm:$0xf]
    %v203 = vld [vmem:[#allocation6 + $0x2c] sm:$0xf]
    %v204 = vld [vmem:[#allocation6 + $0x30] sm:$0xf]
    %v205 = vld [vmem:[#allocation6 + $0x34] sm:$0xf]
    %v206 = vld [vmem:[#allocation6 + $0x38] sm:$0xf]
    %v207 = vld [vmem:[#allocation6 + $0x3c] sm:$0xf]
    %v224 = vunpack.c.l.b16 %v192
    %v225 = vunpack.c.l.b16 %v193
    %v226 = vunpack.c.l.b16 %v194
    %v227 = vunpack.c.l.b16 %v195
    %v228 = vunpack.c.l.b16 %v196
    %v229 = vunpack.c.l.b16 %v197
    %v230 = vunpack.c.l.b16 %v198
    %v231 = vunpack.c.l.b16 %v199
    %v232 = vunpack.c.l.b16 %v200
    %v233 = vunpack.c.l.b16 %v201
    %v234 = vunpack.c.l.b16 %v202
    %v235 = vunpack.c.l.b16 %v203
    %v236 = vunpack.c.l.b16 %v204
    %v237 = vunpack.c.l.b16 %v205
    %v238 = vunpack.c.l.b16 %v206
    %v239 = vunpack.c.l.b16 %v207
    %v240 = vpack.c.b16 %v225, %v224
    %v241 = vpack.c.b16 %v227, %v226
    %v242 = vpack.c.b16 %v229, %v228
    %v243 = vpack.c.b16 %v231, %v230
    %v244 = vpack.c.b16 %v233, %v232
    %v245 = vpack.c.b16 %v235, %v234
    %v246 = vpack.c.b16 %v237, %v236
    %v247 = vpack.c.b16 %v239, %v238
    %256 = vmatprep.subr.bf16.mxu0 0
    %257 = vmatpush1.bf16.msra.mxu0 %v240
    %258 = vmatprep.subr.bf16.mxu0 0
    %259 = vmatpush1.bf16.msra.mxu0 %v241
    %260 = vmatprep.subr.bf16.mxu0 0
    %261 = vmatpush1.bf16.msra.mxu0 %v242
    %262 = vmatprep.subr.bf16.mxu0 0
    %263 = vmatpush1.bf16.msra.mxu0 %v243
    %264 = vmatprep.subr.bf16.mxu0 0
    %265 = vmatpush1.bf16.msra.mxu0 %v244
    %266 = vmatprep.subr.bf16.mxu0 0
    %267 = vmatpush1.bf16.msra.mxu0 %v245
    %268 = vmatprep.subr.bf16.mxu0 0
    %269 = vmatpush1.bf16.msra.mxu0 %v246
    %270 = vmatprep.subr.bf16.mxu0 0
    %271 = vmatpush1.bf16.msra.mxu0 %v247
    %272 = vmatprep.subr.bf16.mxu0 0
    %273 = vmatpush1.bf16.msra.mxu0 0
    %274 = vmatprep.subr.bf16.mxu0 0
    %275 = vmatpush1.bf16.msra.mxu0 0
    %276 = vmatprep.subr.bf16.mxu0 0
    %277 = vmatpush1.bf16.msra.mxu0 0
    %278 = vmatprep.subr.bf16.mxu0 0
    %279 = vmatpush1.bf16.msra.mxu0 0
    %280 = vmatprep.subr.bf16.mxu0 0
    %281 = vmatpush1.bf16.msra.mxu0 0
    %282 = vmatprep.subr.bf16.mxu0 0
    %283 = vmatpush1.bf16.msra.mxu0 0
    %284 = vmatprep.subr.bf16.mxu0 0
    %285 = vmatpush1.bf16.msra.mxu0 0
    %286 = vmatprep.subr.bf16.mxu0 0
    %287 = vmatpush1.bf16.msra.mxu0 0
    %288 = vmatprep.mubr.bf16.mxu0 0
    %289 = vmatmul.mubr.bf16.gmra.mrb[0].mxu0 %v191
    %v290 = vpop.f32.mrb[0].mxu0
    %v291 = vadd.f32 0.0, %v290
    %v292 = vpop.f32.mrb[0].mxu0
    %v293 = vpop.f32.mrb[0].mxu0
    %v294 = vpop.f32.mrb[0].mxu0
    %295 = vdwg.mxu0
    %v296 = vadd.f32 %v190, %v291
    %v297 = vtanh.pop %v296
    %298 = vst [vmem:[#allocation2] sm:$0x1] %v297
    %v299 = vld [vmem:[#allocation2 + $0x1] sm:$0x1]
    %v300 = vpack.c.bf16 %v297, %v297
    %v301 = vld [vmem:[#allocation6] sm:$0xf]
    %v302 = vld [vmem:[#allocation6 + $0x4] sm:$0xf]
    %v303 = vld [vmem:[#allocation6 + $0x8] sm:$0xf]
    %v304 = vld [vmem:[#allocation6 + $0xc] sm:$0xf]
    %v305 = vld [vmem:[#allocation6 + $0x10] sm:$0xf]
    %v306 = vld [vmem:[#allocation6 + $0x14] sm:$0xf]
    %v307 = vld [vmem:[#allocation6 + $0x18] sm:$0xf]
    %v308 = vld [vmem:[#allocation6 + $0x1c] sm:$0xf]
    %v309 = vld [vmem:[#allocation6 + $0x20] sm:$0xf]
    %v310 = vld [vmem:[#allocation6 + $0x24] sm:$0xf]
    %v311 = vld [vmem:[#allocation6 + $0x28] sm:$0xf]
    %v312 = vld [vmem:[#allocation6 + $0x2c] sm:$0xf]
    %v313 = vld [vmem:[#allocation6 + $0x30] sm:$0xf]
    %v314 = vld [vmem:[#allocation6 + $0x34] sm:$0xf]
    %v315 = vld [vmem:[#allocation6 + $0x38] sm:$0xf]
    %v316 = vld [vmem:[#allocation6 + $0x3c] sm:$0xf]
    %v333 = vunpack.c.l.b16 %v301
    %v334 = vunpack.c.l.b16 %v302
    %v335 = vunpack.c.l.b16 %v303
    %v336 = vunpack.c.l.b16 %v304
    %v337 = vunpack.c.l.b16 %v305
    %v338 = vunpack.c.l.b16 %v306
    %v339 = vunpack.c.l.b16 %v307
    %v340 = vunpack.c.l.b16 %v308
    %v341 = vunpack.c.l.b16 %v309
    %v342 = vunpack.c.l.b16 %v310
    %v343 = vunpack.c.l.b16 %v311
    %v344 = vunpack.c.l.b16 %v312
    %v345 = vunpack.c.l.b16 %v313
    %v346 = vunpack.c.l.b16 %v314
    %v347 = vunpack.c.l.b16 %v315
    %v348 = vunpack.c.l.b16 %v316
    %v349 = vpack.c.b16 %v334, %v333
    %v350 = vpack.c.b16 %v336, %v335
    %v351 = vpack.c.b16 %v338, %v337
    %v352 = vpack.c.b16 %v340, %v339
    %v353 = vpack.c.b16 %v342, %v341
    %v354 = vpack.c.b16 %v344, %v343
    %v355 = vpack.c.b16 %v346, %v345
    %v356 = vpack.c.b16 %v348, %v347
    %365 = vmatprep.subr.bf16.mxu0 0
    %366 = vmatpush1.bf16.msra.mxu0 %v349
    %367 = vmatprep.subr.bf16.mxu0 0
    %368 = vmatpush1.bf16.msra.mxu0 %v350
    %369 = vmatprep.subr.bf16.mxu0 0
    %370 = vmatpush1.bf16.msra.mxu0 %v351
    %371 = vmatprep.subr.bf16.mxu0 0
    %372 = vmatpush1.bf16.msra.mxu0 %v352
    %373 = vmatprep.subr.bf16.mxu0 0
    %374 = vmatpush1.bf16.msra.mxu0 %v353
    %375 = vmatprep.subr.bf16.mxu0 0
    %376 = vmatpush1.bf16.msra.mxu0 %v354
    %377 = vmatprep.subr.bf16.mxu0 0
    %378 = vmatpush1.bf16.msra.mxu0 %v355
    %379 = vmatprep.subr.bf16.mxu0 0
    %380 = vmatpush1.bf16.msra.mxu0 %v356
    %381 = vmatprep.subr.bf16.mxu0 0
    %382 = vmatpush1.bf16.msra.mxu0 0
    %383 = vmatprep.subr.bf16.mxu0 0
    %384 = vmatpush1.bf16.msra.mxu0 0
    %385 = vmatprep.subr.bf16.mxu0 0
    %386 = vmatpush1.bf16.msra.mxu0 0
    %387 = vmatprep.subr.bf16.mxu0 0
    %388 = vmatpush1.bf16.msra.mxu0 0
    %389 = vmatprep.subr.bf16.mxu0 0
    %390 = vmatpush1.bf16.msra.mxu0 0
    %391 = vmatprep.subr.bf16.mxu0 0
    %392 = vmatpush1.bf16.msra.mxu0 0
    %393 = vmatprep.subr.bf16.mxu0 0
    %394 = vmatpush1.bf16.msra.mxu0 0
    %395 = vmatprep.subr.bf16.mxu0 0
    %396 = vmatpush1.bf16.msra.mxu0 0
    %397 = vmatprep.mubr.bf16.mxu0 0
    %398 = vmatmul.mubr.bf16.gmra.mrb[0].mxu0 %v300
    %v399 = vpop.f32.mrb[0].mxu0
    %v400 = vadd.f32 0.0, %v399
    %v401 = vpop.f32.mrb[0].mxu0
    %v402 = vpop.f32.mrb[0].mxu0
    %v403 = vpop.f32.mrb[0].mxu0
    %404 = vdwg.mxu0
    %v405 = vadd.f32 %v299, %v400
    %v406 = vtanh.pop %v405
    %407 = vst [vmem:[#allocation2 + $0x1] sm:$0x1] %v406
    %v408 = vld [vmem:[#allocation2 + $0x2] sm:$0x1]
    %v409 = vpack.c.bf16 %v406, %v406
    %v410 = vld [vmem:[#allocation6] sm:$0xf]
    %v411 = vld [vmem:[#allocation6 + $0x4] sm:$0xf]
    %v412 = vld [vmem:[#allocation6 + $0x8] sm:$0xf]
    %v413 = vld [vmem:[#allocation6 + $0xc] sm:$0xf]
    %v414 = vld [vmem:[#allocation6 + $0x10] sm:$0xf]
    %v415 = vld [vmem:[#allocation6 + $0x14] sm:$0xf]
    %v416 = vld [vmem:[#allocation6 + $0x18] sm:$0xf]
    %v417 = vld [vmem:[#allocation6 + $0x1c] sm:$0xf]
    %v418 = vld [vmem:[#allocation6 + $0x20] sm:$0xf]
    %v419 = vld [vmem:[#allocation6 + $0x24] sm:$0xf]
    %v420 = vld [vmem:[#allocation6 + $0x28] sm:$0xf]
    %v421 = vld [vmem:[#allocation6 + $0x2c] sm:$0xf]
    %v422 = vld [vmem:[#allocation6 + $0x30] sm:$0xf]
    %v423 = vld [vmem:[#allocation6 + $0x34] sm:$0xf]
    %v424 = vld [vmem:[#allocation6 + $0x38] sm:$0xf]
    %v425 = vld [vmem:[#allocation6 + $0x3c] sm:$0xf]
    %v442 = vunpack.c.l.b16 %v410
    %v443 = vunpack.c.l.b16 %v411
    %v444 = vunpack.c.l.b16 %v412
    %v445 = vunpack.c.l.b16 %v413
    %v446 = vunpack.c.l.b16 %v414
    %v447 = vunpack.c.l.b16 %v415
    %v448 = vunpack.c.l.b16 %v416
    %v449 = vunpack.c.l.b16 %v417
    %v450 = vunpack.c.l.b16 %v418
    %v451 = vunpack.c.l.b16 %v419
    %v452 = vunpack.c.l.b16 %v420
    %v453 = vunpack.c.l.b16 %v421
    %v454 = vunpack.c.l.b16 %v422
    %v455 = vunpack.c.l.b16 %v423
    %v456 = vunpack.c.l.b16 %v424
    %v457 = vunpack.c.l.b16 %v425
    %v458 = vpack.c.b16 %v443, %v442
    %v459 = vpack.c.b16 %v445, %v444
    %v460 = vpack.c.b16 %v447, %v446
    %v461 = vpack.c.b16 %v449, %v448
    %v462 = vpack.c.b16 %v451, %v450
    %v463 = vpack.c.b16 %v453, %v452
    %v464 = vpack.c.b16 %v455, %v454
    %v465 = vpack.c.b16 %v457, %v456
    %474 = vmatprep.subr.bf16.mxu0 0
    %475 = vmatpush1.bf16.msra.mxu0 %v458
    %476 = vmatprep.subr.bf16.mxu0 0
    %477 = vmatpush1.bf16.msra.mxu0 %v459
    %478 = vmatprep.subr.bf16.mxu0 0
    %479 = vmatpush1.bf16.msra.mxu0 %v460
    %480 = vmatprep.subr.bf16.mxu0 0
    %481 = vmatpush1.bf16.msra.mxu0 %v461
    %482 = vmatprep.subr.bf16.mxu0 0
    %483 = vmatpush1.bf16.msra.mxu0 %v462
    %484 = vmatprep.subr.bf16.mxu0 0
    %485 = vmatpush1.bf16.msra.mxu0 %v463
    %486 = vmatprep.subr.bf16.mxu0 0
    %487 = vmatpush1.bf16.msra.mxu0 %v464
    %488 = vmatprep.subr.bf16.mxu0 0
    %489 = vmatpush1.bf16.msra.mxu0 %v465
    %490 = vmatprep.subr.bf16.mxu0 0
    %491 = vmatpush1.bf16.msra.mxu0 0
    %492 = vmatprep.subr.bf16.mxu0 0
    %493 = vmatpush1.bf16.msra.mxu0 0
    %494 = vmatprep.subr.bf16.mxu0 0
    %495 = vmatpush1.bf16.msra.mxu0 0
    %496 = vmatprep.subr.bf16.mxu0 0
    %497 = vmatpush1.bf16.msra.mxu0 0
    %498 = vmatprep.subr.bf16.mxu0 0
    %499 = vmatpush1.bf16.msra.mxu0 0
    %500 = vmatprep.subr.bf16.mxu0 0
    %501 = vmatpush1.bf16.msra.mxu0 0
    %502 = vmatprep.subr.bf16.mxu0 0
    %503 = vmatpush1.bf16.msra.mxu0 0
    %504 = vmatprep.subr.bf16.mxu0 0
    %505 = vmatpush1.bf16.msra.mxu0 0
    %506 = vmatprep.mubr.bf16.mxu0 0
    %507 = vmatmul.mubr.bf16.gmra.mrb[0].mxu0 %v409
    %v508 = vpop.f32.mrb[0].mxu0
    %v509 = vadd.f32 0.0, %v508
    %v510 = vpop.f32.mrb[0].mxu0
    %v511 = vpop.f32.mrb[0].mxu0
    %v512 = vpop.f32.mrb[0].mxu0
    %513 = vdwg.mxu0
    %v514 = vadd.f32 %v408, %v509
    %v515 = vtanh.pop %v514
    %516 = vst [vmem:[#allocation2 + $0x2] sm:$0x1] %v515
    %v517 = vld [vmem:[#allocation2 + $0x3] sm:$0x1]
    %v518 = vpack.c.bf16 %v515, %v515
    %v519 = vld [vmem:[#allocation6] sm:$0xf]
    %v520 = vld [vmem:[#allocation6 + $0x4] sm:$0xf]
    %v521 = vld [vmem:[#allocation6 + $0x8] sm:$0xf]
    %v522 = vld [vmem:[#allocation6 + $0xc] sm:$0xf]
    %v523 = vld [vmem:[#allocation6 + $0x10] sm:$0xf]
    %v524 = vld [vmem:[#allocation6 + $0x14] sm:$0xf]
    %v525 = vld [vmem:[#allocation6 + $0x18] sm:$0xf]
    %v526 = vld [vmem:[#allocation6 + $0x1c] sm:$0xf]
    %v527 = vld [vmem:[#allocation6 + $0x20] sm:$0xf]
    %v528 = vld [vmem:[#allocation6 + $0x24] sm:$0xf]
    %v529 = vld [vmem:[#allocation6 + $0x28] sm:$0xf]
    %v530 = vld [vmem:[#allocation6 + $0x2c] sm:$0xf]
    %v531 = vld [vmem:[#allocation6 + $0x30] sm:$0xf]
    %v532 = vld [vmem:[#allocation6 + $0x34] sm:$0xf]
    %v533 = vld [vmem:[#allocation6 + $0x38] sm:$0xf]
    %v534 = vld [vmem:[#allocation6 + $0x3c] sm:$0xf]
    %v551 = vunpack.c.l.b16 %v519
    %v552 = vunpack.c.l.b16 %v520
    %v553 = vunpack.c.l.b16 %v521
    %v554 = vunpack.c.l.b16 %v522
    %v555 = vunpack.c.l.b16 %v523
    %v556 = vunpack.c.l.b16 %v524
    %v557 = vunpack.c.l.b16 %v525
    %v558 = vunpack.c.l.b16 %v526
    %v559 = vunpack.c.l.b16 %v527
    %v560 = vunpack.c.l.b16 %v528
    %v561 = vunpack.c.l.b16 %v529
    %v562 = vunpack.c.l.b16 %v530
    %v563 = vunpack.c.l.b16 %v531
    %v564 = vunpack.c.l.b16 %v532
    %v565 = vunpack.c.l.b16 %v533
    %v566 = vunpack.c.l.b16 %v534
    %v567 = vpack.c.b16 %v552, %v551
    %v568 = vpack.c.b16 %v554, %v553
    %v569 = vpack.c.b16 %v556, %v555
    %v570 = vpack.c.b16 %v558, %v557
    %v571 = vpack.c.b16 %v560, %v559
    %v572 = vpack.c.b16 %v562, %v561
    %v573 = vpack.c.b16 %v564, %v563
    %v574 = vpack.c.b16 %v566, %v565
    %583 = vmatprep.subr.bf16.mxu0 0
    %584 = vmatpush1.bf16.msra.mxu0 %v567
    %585 = vmatprep.subr.bf16.mxu0 0
    %586 = vmatpush1.bf16.msra.mxu0 %v568
    %587 = vmatprep.subr.bf16.mxu0 0
    %588 = vmatpush1.bf16.msra.mxu0 %v569
    %589 = vmatprep.subr.bf16.mxu0 0
    %590 = vmatpush1.bf16.msra.mxu0 %v570
    %591 = vmatprep.subr.bf16.mxu0 0
    %592 = vmatpush1.bf16.msra.mxu0 %v571
    %593 = vmatprep.subr.bf16.mxu0 0
    %594 = vmatpush1.bf16.msra.mxu0 %v572
    %595 = vmatprep.subr.bf16.mxu0 0
    %596 = vmatpush1.bf16.msra.mxu0 %v573
    %597 = vmatprep.subr.bf16.mxu0 0
    %598 = vmatpush1.bf16.msra.mxu0 %v574
    %599 = vmatprep.subr.bf16.mxu0 0
    %600 = vmatpush1.bf16.msra.mxu0 0
    %601 = vmatprep.subr.bf16.mxu0 0
    %602 = vmatpush1.bf16.msra.mxu0 0
    %603 = vmatprep.subr.bf16.mxu0 0
    %604 = vmatpush1.bf16.msra.mxu0 0
    %605 = vmatprep.subr.bf16.mxu0 0
    %606 = vmatpush1.bf16.msra.mxu0 0
    %607 = vmatprep.subr.bf16.mxu0 0
    %608 = vmatpush1.bf16.msra.mxu0 0
    %609 = vmatprep.subr.bf16.mxu0 0
    %610 = vmatpush1.bf16.msra.mxu0 0
    %611 = vmatprep.subr.bf16.mxu0 0
    %612 = vmatpush1.bf16.msra.mxu0 0
    %613 = vmatprep.subr.bf16.mxu0 0
    %614 = vmatpush1.bf16.msra.mxu0 0
    %615 = vmatprep.mubr.bf16.mxu0 0
    %616 = vmatmul.mubr.bf16.gmra.mrb[0].mxu0 %v518
    %v617 = vpop.f32.mrb[0].mxu0
    %v618 = vadd.f32 0.0, %v617
    %v619 = vpop.f32.mrb[0].mxu0
    %v620 = vpop.f32.mrb[0].mxu0
    %v621 = vpop.f32.mrb[0].mxu0
    %622 = vdwg.mxu0
    %v623 = vadd.f32 %v517, %v618
    %v624 = vtanh.pop %v623
    %625 = vst [vmem:[#allocation2 + $0x3] sm:$0x1] %v624
    %v626 = vld [vmem:[#allocation2 + $0x4] sm:$0x1]
    %v627 = vpack.c.bf16 %v624, %v624
    %v628 = vld [vmem:[#allocation6] sm:$0xf]
    %v629 = vld [vmem:[#allocation6 + $0x4] sm:$0xf]
    %v630 = vld [vmem:[#allocation6 + $0x8] sm:$0xf]
    %v631 = vld [vmem:[#allocation6 + $0xc] sm:$0xf]
    %v632 = vld [vmem:[#allocation6 + $0x10] sm:$0xf]
    %v633 = vld [vmem:[#allocation6 + $0x14] sm:$0xf]
    %v634 = vld [vmem:[#allocation6 + $0x18] sm:$0xf]
    %v635 = vld [vmem:[#allocation6 + $0x1c] sm:$0xf]
    %v636 = vld [vmem:[#allocation6 + $0x20] sm:$0xf]
    %v637 = vld [vmem:[#allocation6 + $0x24] sm:$0xf]
    %v638 = vld [vmem:[#allocation6 + $0x28] sm:$0xf]
    %v639 = vld [vmem:[#allocation6 + $0x2c] sm:$0xf]
    %v640 = vld [vmem:[#allocation6 + $0x30] sm:$0xf]
    %v641 = vld [vmem:[#allocation6 + $0x34] sm:$0xf]
    %v642 = vld [vmem:[#allocation6 + $0x38] sm:$0xf]
    %v643 = vld [vmem:[#allocation6 + $0x3c] sm:$0xf]
    %v660 = vunpack.c.l.b16 %v628
    %v661 = vunpack.c.l.b16 %v629
    %v662 = vunpack.c.l.b16 %v630
    %v663 = vunpack.c.l.b16 %v631
    %v664 = vunpack.c.l.b16 %v632
    %v665 = vunpack.c.l.b16 %v633
    %v666 = vunpack.c.l.b16 %v634
    %v667 = vunpack.c.l.b16 %v635
    %v668 = vunpack.c.l.b16 %v636
    %v669 = vunpack.c.l.b16 %v637
    %v670 = vunpack.c.l.b16 %v638
    %v671 = vunpack.c.l.b16 %v639
    %v672 = vunpack.c.l.b16 %v640
    %v673 = vunpack.c.l.b16 %v641
    %v674 = vunpack.c.l.b16 %v642
    %v675 = vunpack.c.l.b16 %v643
    %v676 = vpack.c.b16 %v661, %v660
    %v677 = vpack.c.b16 %v663, %v662
    %v678 = vpack.c.b16 %v665, %v664
    %v679 = vpack.c.b16 %v667, %v666
    %v680 = vpack.c.b16 %v669, %v668
    %v681 = vpack.c.b16 %v671, %v670
    %v682 = vpack.c.b16 %v673, %v672
    %v683 = vpack.c.b16 %v675, %v674
    %692 = vmatprep.subr.bf16.mxu0 0
    %693 = vmatpush1.bf16.msra.mxu0 %v676
    %694 = vmatprep.subr.bf16.mxu0 0
    %695 = vmatpush1.bf16.msra.mxu0 %v677
    %696 = vmatprep.subr.bf16.mxu0 0
    %697 = vmatpush1.bf16.msra.mxu0 %v678
    %698 = vmatprep.subr.bf16.mxu0 0
    %699 = vmatpush1.bf16.msra.mxu0 %v679
    %700 = vmatprep.subr.bf16.mxu0 0
    %701 = vmatpush1.bf16.msra.mxu0 %v680
    %702 = vmatprep.subr.bf16.mxu0 0
    %703 = vmatpush1.bf16.msra.mxu0 %v681
    %704 = vmatprep.subr.bf16.mxu0 0
    %705 = vmatpush1.bf16.msra.mxu0 %v682
    %706 = vmatprep.subr.bf16.mxu0 0
    %707 = vmatpush1.bf16.msra.mxu0 %v683
    %708 = vmatprep.subr.bf16.mxu0 0
    %709 = vmatpush1.bf16.msra.mxu0 0
    %710 = vmatprep.subr.bf16.mxu0 0
    %711 = vmatpush1.bf16.msra.mxu0 0
    %712 = vmatprep.subr.bf16.mxu0 0
    %713 = vmatpush1.bf16.msra.mxu0 0
    %714 = vmatprep.subr.bf16.mxu0 0
    %715 = vmatpush1.bf16.msra.mxu0 0
    %716 = vmatprep.subr.bf16.mxu0 0
    %717 = vmatpush1.bf16.msra.mxu0 0
    %718 = vmatprep.subr.bf16.mxu0 0
    %719 = vmatpush1.bf16.msra.mxu0 0
    %720 = vmatprep.subr.bf16.mxu0 0
    %721 = vmatpush1.bf16.msra.mxu0 0
    %722 = vmatprep.subr.bf16.mxu0 0
    %723 = vmatpush1.bf16.msra.mxu0 0
    %724 = vmatprep.mubr.bf16.mxu0 0
    %725 = vmatmul.mubr.bf16.gmra.mrb[0].mxu0 %v627
    %v726 = vpop.f32.mrb[0].mxu0
    %v727 = vadd.f32 0.0, %v726
    %v728 = vpop.f32.mrb[0].mxu0
    %v729 = vpop.f32.mrb[0].mxu0
    %v730 = vpop.f32.mrb[0].mxu0
    %731 = vdwg.mxu0
    %v732 = vadd.f32 %v626, %v727
    %v733 = vtanh.pop %v732
    %734 = vst [vmem:[#allocation2 + $0x4] sm:$0x1] %v733
    %v735 = vld [vmem:[#allocation2 + $0x5] sm:$0x1]
    %v736 = vpack.c.bf16 %v733, %v733
    %v737 = vld [vmem:[#allocation6] sm:$0xf]
    %v738 = vld [vmem:[#allocation6 + $0x4] sm:$0xf]
    %v739 = vld [vmem:[#allocation6 + $0x8] sm:$0xf]
    %v740 = vld [vmem:[#allocation6 + $0xc] sm:$0xf]
    %v741 = vld [vmem:[#allocation6 + $0x10] sm:$0xf]
    %v742 = vld [vmem:[#allocation6 + $0x14] sm:$0xf]
    %v743 = vld [vmem:[#allocation6 + $0x18] sm:$0xf]
    %v744 = vld [vmem:[#allocation6 + $0x1c] sm:$0xf]
    %v745 = vld [vmem:[#allocation6 + $0x20] sm:$0xf]
    %v746 = vld [vmem:[#allocation6 + $0x24] sm:$0xf]
    %v747 = vld [vmem:[#allocation6 + $0x28] sm:$0xf]
    %v748 = vld [vmem:[#allocation6 + $0x2c] sm:$0xf]
    %v749 = vld [vmem:[#allocation6 + $0x30] sm:$0xf]
    %v750 = vld [vmem:[#allocation6 + $0x34] sm:$0xf]
    %v751 = vld [vmem:[#allocation6 + $0x38] sm:$0xf]
    %v752 = vld [vmem:[#allocation6 + $0x3c] sm:$0xf]
    %v769 = vunpack.c.l.b16 %v737
    %v770 = vunpack.c.l.b16 %v738
    %v771 = vunpack.c.l.b16 %v739
    %v772 = vunpack.c.l.b16 %v740
    %v773 = vunpack.c.l.b16 %v741
    %v774 = vunpack.c.l.b16 %v742
    %v775 = vunpack.c.l.b16 %v743
    %v776 = vunpack.c.l.b16 %v744
    %v777 = vunpack.c.l.b16 %v745
    %v778 = vunpack.c.l.b16 %v746
    %v779 = vunpack.c.l.b16 %v747
    %v780 = vunpack.c.l.b16 %v748
    %v781 = vunpack.c.l.b16 %v749
    %v782 = vunpack.c.l.b16 %v750
    %v783 = vunpack.c.l.b16 %v751
    %v784 = vunpack.c.l.b16 %v752
    %v785 = vpack.c.b16 %v770, %v769
    %v786 = vpack.c.b16 %v772, %v771
    %v787 = vpack.c.b16 %v774, %v773
    %v788 = vpack.c.b16 %v776, %v775
    %v789 = vpack.c.b16 %v778, %v777
    %v790 = vpack.c.b16 %v780, %v779
    %v791 = vpack.c.b16 %v782, %v781
    %v792 = vpack.c.b16 %v784, %v783
    %801 = vmatprep.subr.bf16.mxu0 0
    %802 = vmatpush1.bf16.msra.mxu0 %v785
    %803 = vmatprep.subr.bf16.mxu0 0
    %804 = vmatpush1.bf16.msra.mxu0 %v786
    %805 = vmatprep.subr.bf16.mxu0 0
    %806 = vmatpush1.bf16.msra.mxu0 %v787
    %807 = vmatprep.subr.bf16.mxu0 0
    %808 = vmatpush1.bf16.msra.mxu0 %v788
    %809 = vmatprep.subr.bf16.mxu0 0
    %810 = vmatpush1.bf16.msra.mxu0 %v789
    %811 = vmatprep.subr.bf16.mxu0 0
    %812 = vmatpush1.bf16.msra.mxu0 %v790
    %813 = vmatprep.subr.bf16.mxu0 0
    %814 = vmatpush1.bf16.msra.mxu0 %v791
    %815 = vmatprep.subr.bf16.mxu0 0
    %816 = vmatpush1.bf16.msra.mxu0 %v792
    %817 = vmatprep.subr.bf16.mxu0 0
    %818 = vmatpush1.bf16.msra.mxu0 0
    %819 = vmatprep.subr.bf16.mxu0 0
    %820 = vmatpush1.bf16.msra.mxu0 0
    %821 = vmatprep.subr.bf16.mxu0 0
    %822 = vmatpush1.bf16.msra.mxu0 0
    %823 = vmatprep.subr.bf16.mxu0 0
    %824 = vmatpush1.bf16.msra.mxu0 0
    %825 = vmatprep.subr.bf16.mxu0 0
    %826 = vmatpush1.bf16.msra.mxu0 0
    %827 = vmatprep.subr.bf16.mxu0 0
    %828 = vmatpush1.bf16.msra.mxu0 0
    %829 = vmatprep.subr.bf16.mxu0 0
    %830 = vmatpush1.bf16.msra.mxu0 0
    %831 = vmatprep.subr.bf16.mxu0 0
    %832 = vmatpush1.bf16.msra.mxu0 0
    %833 = vmatprep.mubr.bf16.mxu0 0
    %834 = vmatmul.mubr.bf16.gmra.mrb[0].mxu0 %v736
    %v835 = vpop.f32.mrb[0].mxu0
    %v836 = vadd.f32 0.0, %v835
    %v837 = vpop.f32.mrb[0].mxu0
    %v838 = vpop.f32.mrb[0].mxu0
    %v839 = vpop.f32.mrb[0].mxu0
    %840 = vdwg.mxu0
    %v841 = vadd.f32 %v735, %v836
    %v842 = vtanh.pop %v841
    %843 = vst [vmem:[#allocation2 + $0x5] sm:$0x1] %v842
    %v844 = vld [vmem:[#allocation2 + $0x6] sm:$0x1]
    %v845 = vpack.c.bf16 %v842, %v842
    %v846 = vld [vmem:[#allocation6] sm:$0xf]
    %v847 = vld [vmem:[#allocation6 + $0x4] sm:$0xf]
    %v848 = vld [vmem:[#allocation6 + $0x8] sm:$0xf]
    %v849 = vld [vmem:[#allocation6 + $0xc] sm:$0xf]
    %v850 = vld [vmem:[#allocation6 + $0x10] sm:$0xf]
    %v851 = vld [vmem:[#allocation6 + $0x14] sm:$0xf]
    %v852 = vld [vmem:[#allocation6 + $0x18] sm:$0xf]
    %v853 = vld [vmem:[#allocation6 + $0x1c] sm:$0xf]
    %v854 = vld [vmem:[#allocation6 + $0x20] sm:$0xf]
    %v855 = vld [vmem:[#allocation6 + $0x24] sm:$0xf]
    %v856 = vld [vmem:[#allocation6 + $0x28] sm:$0xf]
    %v857 = vld [vmem:[#allocation6 + $0x2c] sm:$0xf]
    %v858 = vld [vmem:[#allocation6 + $0x30] sm:$0xf]
    %v859 = vld [vmem:[#allocation6 + $0x34] sm:$0xf]
    %v860 = vld [vmem:[#allocation6 + $0x38] sm:$0xf]
    %v861 = vld [vmem:[#allocation6 + $0x3c] sm:$0xf]
    %v878 = vunpack.c.l.b16 %v846
    %v879 = vunpack.c.l.b16 %v847
    %v880 = vunpack.c.l.b16 %v848
    %v881 = vunpack.c.l.b16 %v849
    %v882 = vunpack.c.l.b16 %v850
    %v883 = vunpack.c.l.b16 %v851
    %v884 = vunpack.c.l.b16 %v852
    %v885 = vunpack.c.l.b16 %v853
    %v886 = vunpack.c.l.b16 %v854
    %v887 = vunpack.c.l.b16 %v855
    %v888 = vunpack.c.l.b16 %v856
    %v889 = vunpack.c.l.b16 %v857
    %v890 = vunpack.c.l.b16 %v858
    %v891 = vunpack.c.l.b16 %v859
    %v892 = vunpack.c.l.b16 %v860
    %v893 = vunpack.c.l.b16 %v861
    %v894 = vpack.c.b16 %v879, %v878
    %v895 = vpack.c.b16 %v881, %v880
    %v896 = vpack.c.b16 %v883, %v882
    %v897 = vpack.c.b16 %v885, %v884
    %v898 = vpack.c.b16 %v887, %v886
    %v899 = vpack.c.b16 %v889, %v888
    %v900 = vpack.c.b16 %v891, %v890
    %v901 = vpack.c.b16 %v893, %v892
    %910 = vmatprep.subr.bf16.mxu0 0
    %911 = vmatpush1.bf16.msra.mxu0 %v894
    %912 = vmatprep.subr.bf16.mxu0 0
    %913 = vmatpush1.bf16.msra.mxu0 %v895
    %914 = vmatprep.subr.bf16.mxu0 0
    %915 = vmatpush1.bf16.msra.mxu0 %v896
    %916 = vmatprep.subr.bf16.mxu0 0
    %917 = vmatpush1.bf16.msra.mxu0 %v897
    %918 = vmatprep.subr.bf16.mxu0 0
    %919 = vmatpush1.bf16.msra.mxu0 %v898
    %920 = vmatprep.subr.bf16.mxu0 0
    %921 = vmatpush1.bf16.msra.mxu0 %v899
    %922 = vmatprep.subr.bf16.mxu0 0
    %923 = vmatpush1.bf16.msra.mxu0 %v900
    %924 = vmatprep.subr.bf16.mxu0 0
    %925 = vmatpush1.bf16.msra.mxu0 %v901
    %926 = vmatprep.subr.bf16.mxu0 0
    %927 = vmatpush1.bf16.msra.mxu0 0
    %928 = vmatprep.subr.bf16.mxu0 0
    %929 = vmatpush1.bf16.msra.mxu0 0
    %930 = vmatprep.subr.bf16.mxu0 0
    %931 = vmatpush1.bf16.msra.mxu0 0
    %932 = vmatprep.subr.bf16.mxu0 0
    %933 = vmatpush1.bf16.msra.mxu0 0
    %934 = vmatprep.subr.bf16.mxu0 0
    %935 = vmatpush1.bf16.msra.mxu0 0
    %936 = vmatprep.subr.bf16.mxu0 0
    %937 = vmatpush1.bf16.msra.mxu0 0
    %938 = vmatprep.subr.bf16.mxu0 0
    %939 = vmatpush1.bf16.msra.mxu0 0
    %940 = vmatprep.subr.bf16.mxu0 0
    %941 = vmatpush1.bf16.msra.mxu0 0
    %942 = vmatprep.mubr.bf16.mxu0 0
    %943 = vmatmul.mubr.bf16.gmra.mrb[0].mxu0 %v845
    %v944 = vpop.f32.mrb[0].mxu0
    %v945 = vadd.f32 0.0, %v944
    %v946 = vpop.f32.mrb[0].mxu0
    %v947 = vpop.f32.mrb[0].mxu0
    %v948 = vpop.f32.mrb[0].mxu0
    %949 = vdwg.mxu0
    %v950 = vadd.f32 %v844, %v945
    %v951 = vtanh.pop %v950
    %952 = vst [vmem:[#allocation2 + $0x6] sm:$0x1] %v951
    %v953 = vld [vmem:[#allocation2 + $0x7] sm:$0x1]
    %v954 = vpack.c.bf16 %v951, %v951
    %v955 = vld [vmem:[#allocation6] sm:$0xf]
    %v956 = vld [vmem:[#allocation6 + $0x4] sm:$0xf]
    %v957 = vld [vmem:[#allocation6 + $0x8] sm:$0xf]
    %v958 = vld [vmem:[#allocation6 + $0xc] sm:$0xf]
    %v959 = vld [vmem:[#allocation6 + $0x10] sm:$0xf]
    %v960 = vld [vmem:[#allocation6 + $0x14] sm:$0xf]
    %v961 = vld [vmem:[#allocation6 + $0x18] sm:$0xf]
    %v962 = vld [vmem:[#allocation6 + $0x1c] sm:$0xf]
    %v963 = vld [vmem:[#allocation6 + $0x20] sm:$0xf]
    %v964 = vld [vmem:[#allocation6 + $0x24] sm:$0xf]
    %v965 = vld [vmem:[#allocation6 + $0x28] sm:$0xf]
    %v966 = vld [vmem:[#allocation6 + $0x2c] sm:$0xf]
    %v967 = vld [vmem:[#allocation6 + $0x30] sm:$0xf]
    %v968 = vld [vmem:[#allocation6 + $0x34] sm:$0xf]
    %v969 = vld [vmem:[#allocation6 + $0x38] sm:$0xf]
    %v970 = vld [vmem:[#allocation6 + $0x3c] sm:$0xf]
    %v987 = vunpack.c.l.b16 %v955
    %v988 = vunpack.c.l.b16 %v956
    %v989 = vunpack.c.l.b16 %v957
    %v990 = vunpack.c.l.b16 %v958
    %v991 = vunpack.c.l.b16 %v959
    %v992 = vunpack.c.l.b16 %v960
    %v993 = vunpack.c.l.b16 %v961
    %v994 = vunpack.c.l.b16 %v962
    %v995 = vunpack.c.l.b16 %v963
    %v996 = vunpack.c.l.b16 %v964
    %v997 = vunpack.c.l.b16 %v965
    %v998 = vunpack.c.l.b16 %v966
    %v999 = vunpack.c.l.b16 %v967
    %v1000 = vunpack.c.l.b16 %v968
    %v1001 = vunpack.c.l.b16 %v969
    %v1002 = vunpack.c.l.b16 %v970
    %v1003 = vpack.c.b16 %v988, %v987
    %v1004 = vpack.c.b16 %v990, %v989
    %v1005 = vpack.c.b16 %v992, %v991
    %v1006 = vpack.c.b16 %v994, %v993
    %v1007 = vpack.c.b16 %v996, %v995
    %v1008 = vpack.c.b16 %v998, %v997
    %v1009 = vpack.c.b16 %v1000, %v999
    %v1010 = vpack.c.b16 %v1002, %v1001
    %1019 = vmatprep.subr.bf16.mxu0 0
    %1020 = vmatpush1.bf16.msra.mxu0 %v1003
    %1021 = vmatprep.subr.bf16.mxu0 0
    %1022 = vmatpush1.bf16.msra.mxu0 %v1004
    %1023 = vmatprep.subr.bf16.mxu0 0
    %1024 = vmatpush1.bf16.msra.mxu0 %v1005
    %1025 = vmatprep.subr.bf16.mxu0 0
    %1026 = vmatpush1.bf16.msra.mxu0 %v1006
    %1027 = vmatprep.subr.bf16.mxu0 0
    %1028 = vmatpush1.bf16.msra.mxu0 %v1007
    %1029 = vmatprep.subr.bf16.mxu0 0
    %1030 = vmatpush1.bf16.msra.mxu0 %v1008
    %1031 = vmatprep.subr.bf16.mxu0 0
    %1032 = vmatpush1.bf16.msra.mxu0 %v1009
    %1033 = vmatprep.subr.bf16.mxu0 0
    %1034 = vmatpush1.bf16.msra.mxu0 %v1010
    %1035 = vmatprep.subr.bf16.mxu0 0
    %1036 = vmatpush1.bf16.msra.mxu0 0
    %1037 = vmatprep.subr.bf16.mxu0 0
    %1038 = vmatpush1.bf16.msra.mxu0 0
    %1039 = vmatprep.subr.bf16.mxu0 0
    %1040 = vmatpush1.bf16.msra.mxu0 0
    %1041 = vmatprep.subr.bf16.mxu0 0
    %1042 = vmatpush1.bf16.msra.mxu0 0
    %1043 = vmatprep.subr.bf16.mxu0 0
    %1044 = vmatpush1.bf16.msra.mxu0 0
    %1045 = vmatprep.subr.bf16.mxu0 0
    %1046 = vmatpush1.bf16.msra.mxu0 0
    %1047 = vmatprep.subr.bf16.mxu0 0
    %1048 = vmatpush1.bf16.msra.mxu0 0
    %1049 = vmatprep.subr.bf16.mxu0 0
    %1050 = vmatpush1.bf16.msra.mxu0 0
    %1051 = vmatprep.mubr.bf16.mxu0 0
    %1052 = vmatmul.mubr.bf16.gmra.mrb[0].mxu0 %v954
    %v1053 = vpop.f32.mrb[0].mxu0
    %v1054 = vadd.f32 0.0, %v1053
    %v1055 = vpop.f32.mrb[0].mxu0
    %v1056 = vpop.f32.mrb[0].mxu0
    %v1057 = vpop.f32.mrb[0].mxu0
    %1058 = vdwg.mxu0
    %v1059 = vadd.f32 %v953, %v1054
    %v1060 = vtanh.pop %v1059
    %1061 = vst [vmem:[#allocation2 + $0x7] sm:$0x1] %v1060
    %1062 = vst [vmem:[#allocation3] sm:$0x1] %v1060
    %v1063 = vld [vmem:[#allocation2] sm:$0xff]
    %v1064 = vpack.c.bf16 %v1063, %v1063
    %v1065 = vld [vmem:[#allocation8] sm:$0xf]
    %v1066 = vld [vmem:[#allocation8 + $0x4] sm:$0xf]
    %v1067 = vld [vmem:[#allocation8 + $0x8] sm:$0xf]
    %v1068 = vld [vmem:[#allocation8 + $0xc] sm:$0xf]
    %v1069 = vld [vmem:[#allocation8 + $0x10] sm:$0xf]
    %v1070 = vld [vmem:[#allocation8 + $0x14] sm:$0xf]
    %v1071 = vld [vmem:[#allocation8 + $0x18] sm:$0xf]
    %v1072 = vld [vmem:[#allocation8 + $0x1c] sm:$0xf]
    %v1073 = vld [vmem:[#allocation8 + $0x20] sm:$0xf]
    %v1074 = vld [vmem:[#allocation8 + $0x24] sm:$0xf]
    %v1075 = vld [vmem:[#allocation8 + $0x28] sm:$0xf]
    %v1076 = vld [vmem:[#allocation8 + $0x2c] sm:$0xf]
    %v1077 = vld [vmem:[#allocation8 + $0x30] sm:$0xf]
    %v1078 = vld [vmem:[#allocation8 + $0x34] sm:$0xf]
    %v1079 = vld [vmem:[#allocation8 + $0x38] sm:$0xf]
    %v1080 = vld [vmem:[#allocation8 + $0x3c] sm:$0xf]
    %v1081 = vld [vmem:[%s6] sm:$0x1]
    %v1083 = vlaneseq
    %v1084 = vshrl.u32 %v1083, 7
    %v1085 = vsub.s32 0, %v1084
    %v1086 = vrot.slane %v1081, %v1085
    %v1104 = vunpack.c.l.b16 %v1065
    %v1105 = vunpack.c.l.b16 %v1066
    %v1106 = vunpack.c.l.b16 %v1067
    %v1107 = vunpack.c.l.b16 %v1068
    %v1108 = vunpack.c.l.b16 %v1069
    %v1109 = vunpack.c.l.b16 %v1070
    %v1110 = vunpack.c.l.b16 %v1071
    %v1111 = vunpack.c.l.b16 %v1072
    %v1112 = vunpack.c.l.b16 %v1073
    %v1113 = vunpack.c.l.b16 %v1074
    %v1114 = vunpack.c.l.b16 %v1075
    %v1115 = vunpack.c.l.b16 %v1076
    %v1116 = vunpack.c.l.b16 %v1077
    %v1117 = vunpack.c.l.b16 %v1078
    %v1118 = vunpack.c.l.b16 %v1079
    %v1119 = vunpack.c.l.b16 %v1080
    %v1120 = vpack.c.b16 %v1105, %v1104
    %v1121 = vpack.c.b16 %v1107, %v1106
    %v1122 = vpack.c.b16 %v1109, %v1108
    %v1123 = vpack.c.b16 %v1111, %v1110
    %v1124 = vpack.c.b16 %v1113, %v1112
    %v1125 = vpack.c.b16 %v1115, %v1114
    %v1126 = vpack.c.b16 %v1117, %v1116
    %v1127 = vpack.c.b16 %v1119, %v1118
    %1136 = vmatprep.subr.bf16.mxu0 0
    %1137 = vmatpush1.bf16.msra.mxu0 %v1120
    %1138 = vmatprep.subr.bf16.mxu0 0
    %1139 = vmatpush1.bf16.msra.mxu0 %v1121
    %1140 = vmatprep.subr.bf16.mxu0 0
    %1141 = vmatpush1.bf16.msra.mxu0 %v1122
    %1142 = vmatprep.subr.bf16.mxu0 0
    %1143 = vmatpush1.bf16.msra.mxu0 %v1123
    %1144 = vmatprep.subr.bf16.mxu0 0
    %1145 = vmatpush1.bf16.msra.mxu0 %v1124
    %1146 = vmatprep.subr.bf16.mxu0 0
    %1147 = vmatpush1.bf16.msra.mxu0 %v1125
    %1148 = vmatprep.subr.bf16.mxu0 0
    %1149 = vmatpush1.bf16.msra.mxu0 %v1126
    %1150 = vmatprep.subr.bf16.mxu0 0
    %1151 = vmatpush1.bf16.msra.mxu0 %v1127
    %1152 = vmatprep.subr.bf16.mxu0 0
    %1153 = vmatpush1.bf16.msra.mxu0 0
    %1154 = vmatprep.subr.bf16.mxu0 0
    %1155 = vmatpush1.bf16.msra.mxu0 0
    %1156 = vmatprep.subr.bf16.mxu0 0
    %1157 = vmatpush1.bf16.msra.mxu0 0
    %1158 = vmatprep.subr.bf16.mxu0 0
    %1159 = vmatpush1.bf16.msra.mxu0 0
    %1160 = vmatprep.subr.bf16.mxu0 0
    %1161 = vmatpush1.bf16.msra.mxu0 0
    %1162 = vmatprep.subr.bf16.mxu0 0
    %1163 = vmatpush1.bf16.msra.mxu0 0
    %1164 = vmatprep.subr.bf16.mxu0 0
    %1165 = vmatpush1.bf16.msra.mxu0 0
    %1166 = vmatprep.subr.bf16.mxu0 0
    %1167 = vmatpush1.bf16.msra.mxu0 0
    %1168 = vmatprep.mubr.bf16.mxu0 0
    %1169 = vmatmul.mubr.bf16.gmra.mrb[0].mxu0 %v1064
    %v1170 = vpop.f32.mrb[0].mxu0
    %v1171 = vadd.f32 %v1086, %v1170
    %v1172 = vpop.f32.mrb[0].mxu0
    %v1173 = vpop.f32.mrb[0].mxu0
    %v1174 = vpop.f32.mrb[0].mxu0
    %1175 = vdwg.mxu0
    %1176 = vst [vmem:[%s7] sm:$0xff] %v1171
    // Predicated region
    $region46: #{rnn_sequence.1} parent=1 // pred_check
      %p1177 = pneg %p70
    $region47: #{rnn_sequence.1} parent=1 // pred_check_branch
      %1179 = sbr.rel (%p1177) target = $region49
    $region48: #{rnn_sequence.1} parent=1 // pred_region
      %v1180 = vld [vmem:[#allocation3] sm:$0x1]
      %1181 = vst [vmem:[%s8] sm:$0x1] %v1180
    $region49: #{rnn_sequence.1} parent=1 // pred_fallthru
      _
    // Predicated region
    $region50: #{rnn_sequence.1} parent=1 // pred_check
      _
    $region51: #{rnn_sequence.1} parent=1 // pred_check_branch
      %1183 = sbr.rel (0) target = $region53
    $region52: #{rnn_sequence.1} parent=1 // pred_region
      _
    $region53: #{rnn_sequence.1} parent=1 // pred_fallthru
      _
    // Predicated region
    $region54: #{rnn_sequence.1} parent=1 // pred_check
      _
    $region55: #{rnn_sequence.1} parent=1 // pred_check_branch
      %1185 = sbr.rel (0) target = $region57
    $region56: #{rnn_sequence.1} parent=1 // pred_region
      _
    $region57: #{rnn_sequence.1} parent=1 // pred_fallthru
      _
    // Predicated region
    $region58: #{rnn_sequence.1} parent=1 // pred_check
      _
    $region59: #{rnn_sequence.1} parent=1 // pred_check_branch
      %1187 = sbr.rel (0) target = $region61
    $region60: #{rnn_sequence.1} parent=1 // pred_region
      _
    $region61: #{rnn_sequence.1} parent=1 // pred_fallthru
      _
    // Predicated region
    $region62: #{rnn_sequence.1} parent=1 // pred_check
      _
    $region63: #{rnn_sequence.1} parent=1 // pred_check_branch
      %1189 = sbr.rel (0) target = $region65
    $region64: #{rnn_sequence.1} parent=1 // pred_region
      _
    $region65: #{rnn_sequence.1} parent=1 // pred_fallthru
      _
    %1190 = vsyncpa [#allocation5], 1
    %1191 = vsyncpa [#allocation7], 1

</llo_original>
